<compile_context>
chip_gen: v6e
topology: v6e:2x2x1
jax: 0.10.0
libtpu: 0.0.40
codegen_flags: <defaults>
</compile_context>

<pallas_src>
import math

import jax
import jax.numpy as jnp
from jax.experimental import pallas as pl
from jax.experimental.pallas import tpu as pltpu


def _action_embed_kernel(a_ref, m_ref, b_ref, o_ref):
    """One streamed tile: o = cast_f32(a) @ M + b.

    a_ref: (S, Kp)     packed actions in native dtype (cast to f32 here)
    m_ref: (Kp, Kp*D)  block-diagonal expanded Linear weight (VMEM-resident)
    b_ref: (1, Kp*D)   bias tiled Kp times                  (VMEM-resident)
    o_ref: (S, Kp*D)   lane-dense packed output
    """
    a = a_ref[...].astype(jnp.float32)
    out = jnp.dot(a, m_ref[...], preferred_element_type=jnp.float32)
    o_ref[...] = (out + b_ref[...]).astype(o_ref.dtype)


def _choose_pack(d, m_budget_bytes=4 << 20):
    """Actions packed per input row: smallest Kp with Kp*D % 128 == 0, scaled
    up toward 128 (lane-dense A) while the (Kp, Kp*D) f32 weight stays small."""
    kp = 128 // math.gcd(d, 128)
    while kp < 128 and (2 * kp) * (2 * kp) * d * 4 <= m_budget_bytes:
        kp *= 2
    return kp


def action_embedding(actions, weight, bias, *, out_dtype=jnp.float32,
                     out_tile_bytes=4 << 20, core_parallel=False,
                     return_packed=False):
    """Equivalent of nn.Linear(1, D)(actions.float()).

    actions: (..., 1) any float/int dtype (NOT pre-cast; cast happens in-kernel)
    weight:  (D, 1)   PyTorch Linear weight layout
    bias:    (D,)
    returns: (..., D) in out_dtype, or the packed (rows, Kp*D) array if
             return_packed=True (embedding of action k lives at
             out[k // Kp, (k % Kp)*D : (k % Kp + 1)*D]).
    """
    *lead, one = actions.shape
    assert one == 1, "last dim of actions must be 1"
    D = int(weight.shape[0])
    n = math.prod(lead) if lead else 1

    kp = _choose_pack(D)          # actions per packed 128-lane row (128 for D=32)
    L = kp * D                    # output lanes per packed row (multiple of 128)

    out_isz = jnp.dtype(out_dtype).itemsize
    rows = -(-n // kp)                                        # ceil(n / kp)
    s_tile = max(8, (out_tile_bytes // (L * out_isz)) // 8 * 8)
    s_tile = min(s_tile, ((rows + 7) // 8) * 8)               # don't over-pad tiny N
    rows_p = ((rows + s_tile - 1) // s_tile) * s_tile

    # Lane-dense actions: kp actions per row, original dtype (no wrapper cast).
    a_flat = actions.reshape(-1)
    if rows_p * kp != n:
        a_flat = jnp.pad(a_flat, (0, rows_p * kp - n))        # pad rows -> bias, sliced off
    a2d = a_flat.reshape(rows_p, kp)

    w = weight.reshape(-1).astype(jnp.float32)                # (D,)
    b = bias.reshape(-1).astype(jnp.float32)                  # (D,)
    # M[j, k*D + d] = w[d] if j == k else 0  -> A @ M is the packed Linear.
    m = (jnp.eye(kp, dtype=jnp.float32)[:, :, None] * w[None, None, :]).reshape(kp, L)
    b_tld = jnp.tile(b, (kp,)).reshape(1, L)

    a_isz = jnp.dtype(a2d.dtype).itemsize
    work_bytes = (2 * s_tile * L * out_isz      # double-buffered output tiles
                  + 2 * s_tile * kp * a_isz     # double-buffered action tiles
                  + kp * L * 4 + L * 4)         # resident weight + bias
    vmem_limit = int(max(32 << 20, work_bytes + (4 << 20)))

    # TODO(synk): on v7x call with core_parallel=True (and >=2 even grid steps)
    # so both TensorCores split the stream; plain "parallel" does not shard cores.
    row_sem = pltpu.CORE_PARALLEL if core_parallel else "parallel"

    out = pl.pallas_call(
        _action_embed_kernel,
        out_shape=jax.ShapeDtypeStruct((rows_p, L), out_dtype),
        grid_spec=pltpu.PrefetchScalarGridSpec(
            num_scalar_prefetch=0,
            grid=(rows_p // s_tile,),
            in_specs=[
                pl.BlockSpec((s_tile, kp), lambda i: (i, 0)),   # streamed actions tile
                pl.BlockSpec((kp, L), lambda i: (0, 0)),        # weight, VMEM-resident
                pl.BlockSpec((1, L), lambda i: (0, 0)),         # bias,   VMEM-resident
            ],
            out_specs=pl.BlockSpec((s_tile, L), lambda i: (i, 0)),
        ),
        compiler_params=pltpu.CompilerParams(
            dimension_semantics=(row_sem,),
            vmem_limit_bytes=vmem_limit,
        ),
    )(a2d, m, b_tld)

    if return_packed:
        return out

    # NOTE: this unpack is a real (8,128)-relayout copy on TPU (~one extra HBM
    # round trip of the output); fuse into the consumer / use return_packed
    # when it matters end-to-end.
    out = out.reshape(rows_p * kp, D)[:n]
    return out.reshape(*lead, D)


if __name__ == "__main__":
    plm_embed_size = 32
    batch, seq = 2, 8

    key = jax.random.PRNGKey(0)
    k_a, k_w, k_b = jax.random.split(key, 3)

    # Deterministic synthetic parameters (nn.Linear(1, D): weight (D,1), bias (D,))
    bound = 1.0  # 1/sqrt(in_features) with in_features = 1
    weight = jax.random.uniform(k_w, (plm_embed_size, 1),
                                minval=-bound, maxval=bound, dtype=jnp.float32)
    bias = jax.random.uniform(k_b, (plm_embed_size,),
                              minval=-bound, maxval=bound, dtype=jnp.float32)

    # Example actions: (batch, seq, 1)
    actions = jax.random.normal(k_a, (batch, seq, 1), dtype=jnp.float32)

    out = jax.block_until_ready(action_embedding(actions, weight, bias))

    # Reference check against plain JAX (== PyTorch Linear(1, D) semantics)
    ref = actions.astype(jnp.float32) @ weight.T + bias
    assert out.shape == (batch, seq, plm_embed_size)
    assert out.dtype == jnp.float32
    assert jnp.allclose(out, ref, atol=1e-5, rtol=1e-5)

    print("KERNEL_OK")
</pallas_src>

<mosaic_0001>
module attributes {stable_mosaic.version = 11 : i64} {
  func.func @_action_embed_kernel(%arg0: i32, %arg1: memref<8x128xf32, #tpu.memory_space<vmem>>, %arg2: memref<128x4096xf32, #tpu.memory_space<vmem>>, %arg3: memref<1x4096xf32, #tpu.memory_space<vmem>>, %arg4: memref<8x4096xf32, #tpu.memory_space<vmem>>) attributes {dimension_semantics = [#tpu.dimension_semantics<parallel>], iteration_bounds = array<i64: 1>, scalar_prefetch = 0 : i64, scratch_operands = 0 : i64, tpu.core_type = #tpu.core_type<tc>, window_params = [{transform_indices = @transform_0, window_bounds = array<i64: 8, 128>}, {pipeline_mode = #tpu.pipeline_mode<synchronous>, transform_indices = @transform_1, window_bounds = array<i64: 128, 4096>}, {pipeline_mode = #tpu.pipeline_mode<synchronous>, transform_indices = @transform_2, window_bounds = array<i64: 1, 4096>}, {transform_indices = @transform_3, window_bounds = array<i64: 8, 4096>}]} {
    %c0 = arith.constant 0 : index
    %c0_0 = arith.constant 0 : index
    %0 = vector.load %arg1[%c0, %c0_0] : memref<8x128xf32, #tpu.memory_space<vmem>>, vector<8x128xf32>
    %c0_1 = arith.constant 0 : index
    %c0_2 = arith.constant 0 : index
    %1 = vector.load %arg2[%c0_1, %c0_2] : memref<128x4096xf32, #tpu.memory_space<vmem>>, vector<128x4096xf32>
    %cst = arith.constant dense<0.000000e+00> : vector<8x4096xf32>
    %2 = tpu.matmul %0, %1, %cst {dimension_numbers = #tpu.dot_dimension_numbers<[1], [0], [0], [1], [0, 0, 1, 1], [], []>} : vector<8x128xf32>, vector<128x4096xf32>, vector<8x4096xf32> -> vector<8x4096xf32>
    %c0_3 = arith.constant 0 : index
    %c0_4 = arith.constant 0 : index
    %3 = vector.load %arg3[%c0_3, %c0_4] : memref<1x4096xf32, #tpu.memory_space<vmem>>, vector<1x4096xf32>
    %4 = vector.broadcast %3 : vector<1x4096xf32> to vector<8x4096xf32>
    %5 = arith.addf %2, %4 : vector<8x4096xf32>
    %c0_5 = arith.constant 0 : index
    %c0_6 = arith.constant 0 : index
    %6 = vector.load %arg4[%c0_5, %c0_6] : memref<8x4096xf32, #tpu.memory_space<vmem>>, vector<8x4096xf32>
    tpu.vector_store %arg4[%c0_5, %c0_6], %5 {strides = array<i32>} : memref<8x4096xf32, #tpu.memory_space<vmem>>, vector<8x4096xf32>,
    return
  }
  func.func @transform_0(%arg0: i32) -> (i32, i32) {
    %c0_i32 = arith.constant 0 : i32
    %c0_i32_0 = arith.constant 0 : i32
    return %arg0, %c0_i32 : i32, i32
  }
  func.func @transform_1(%arg0: i32) -> (i32, i32) {
    %c0_i32 = arith.constant 0 : i32
    %c0_i32_0 = arith.constant 0 : i32
    %c0_i32_1 = arith.constant 0 : i32
    return %c0_i32, %c0_i32_0 : i32, i32
  }
  func.func @transform_2(%arg0: i32) -> (i32, i32) {
    %c0_i32 = arith.constant 0 : i32
    %c0_i32_0 = arith.constant 0 : i32
    %c0_i32_1 = arith.constant 0 : i32
    return %c0_i32, %c0_i32_0 : i32, i32
  }
  func.func @transform_3(%arg0: i32) -> (i32, i32) {
    %c0_i32 = arith.constant 0 : i32
    %c0_i32_0 = arith.constant 0 : i32
    return %arg0, %c0_i32 : i32, i32
  }
}

</mosaic_0001>

<llo_original>
// kernel: tpu_custom_call.1
$region0: #{tpu_custom_call.1}
  #allocation0 [shape = 'u32[]', space=smem, size = 0x4, offset = 0x4, fixed_abs, tag = 'smem constant byte address 0x4 - core index']
  #allocation1 [shape = 'u32[144,128]{1,0:T(1,128)}', space=vmem, size = 0x12000, scoped, tag = 'internal scratch']
  %s0 = inlined_call_operand.hbm [shape: f32[8,128], index: 0, kind: input, shape index: {}]
  %s1 = inlined_call_operand.hbm [shape: f32[128,4096], index: 1, kind: input, shape index: {}]
  %s2 = inlined_call_operand.hbm [shape: f32[1,4096], index: 2, kind: input, shape index: {}]
  %s3 = inlined_call_operand.hbm [shape: f32[8,4096], index: 3, kind: output, shape index: {}]
  %s4 = sld [smem:[#allocation0]]
  $region34: #{tpu_custom_call.1} parent=0
    _
  %s6 = ssub.s32 1, %s4
  %s7 = scalar_select 0, %s6, %s4
  $region1: #{tpu_custom_call.1} parent=0
    #allocation2 [shape = 'u8[4096]{0}', space=vmem, size = 0x1000, scoped, tag = 'input window, operand 0, single buffered']
    #allocation3 [shape = 's32[1]{0}', space=sflag, size = 0x4, scoped, tag = 'scoped memory for tpu_custom_call.1']
    #allocation4 [shape = 's32[1]{0}', space=sflag, size = 0x4, scoped, tag = 'scoped memory for tpu_custom_call.1']
    #allocation5 [shape = 'u8[2097152]{0}', space=vmem, size = 0x200000, scoped, tag = 'input window, operand 1, single buffered']
    #allocation6 [shape = 's32[1]{0}', space=sflag, size = 0x4, scoped, tag = 'scoped memory for tpu_custom_call.1']
    #allocation7 [shape = 'u8[16384]{0}', space=vmem, size = 0x4000, scoped, tag = 'input window, operand 2, single buffered']
    #allocation8 [shape = 'u8[131072]{0}', space=vmem, size = 0x20000, scoped, tag = 'output window, operand 0, single buffered']
    %8 = vsyncpa [#allocation3], 0
    %9 = vsyncpa [#allocation6], 0
    %10 = vsyncpa [#allocation4], 0
    // Predicated region
    $region2: #{tpu_custom_call.1} parent=1 // pred_check
      _
    $region3: #{tpu_custom_call.1} parent=1 // pred_check_branch
      %12 = sbr.rel (0) target = $region5
    $region4: #{tpu_custom_call.1} parent=1 // pred_region
      %s14 = ssub.s32 128, 128
      %15 = vsyncadd [#allocation3], %s14
      %s17 = sshll.u32 [#allocation2], 4
      %s18 = int_to_ptr.vmem [resolvable:$true] %s17
      %20 = dma.hbm_to_vmem [thread:$0]  %s0, 128, %s18, [#allocation3]
    $region5: #{tpu_custom_call.1} parent=1 // pred_fallthru
      _
    // Predicated region
    $region6: #{tpu_custom_call.1} parent=1 // pred_check
      _
    $region7: #{tpu_custom_call.1} parent=1 // pred_check_branch
      %22 = sbr.rel (0) target = $region9
    $region8: #{tpu_custom_call.1} parent=1 // pred_region
      %s24 = ssub.s32 65536, 65536
      %25 = vsyncadd [#allocation6], %s24
      %s26 = sshll.u32 [#allocation5], 4
      %s27 = int_to_ptr.vmem [resolvable:$true] %s26
      %32 = dma.hbm_to_vmem [thread:$0]  %s1, 65536, %s27, [#allocation6], 4096, 4096, 256
    $region9: #{tpu_custom_call.1} parent=1 // pred_fallthru
      _
    // Predicated region
    $region10: #{tpu_custom_call.1} parent=1 // pred_check
      _
    $region11: #{tpu_custom_call.1} parent=1 // pred_check_branch
      %34 = sbr.rel (0) target = $region13
    $region12: #{tpu_custom_call.1} parent=1 // pred_region
      %s36 = ssub.s32 512, 512
      %37 = vsyncadd [#allocation6], %s36
      %s39 = sshll.u32 [#allocation7], 4
      %s40 = int_to_ptr.vmem [resolvable:$true] %s39
      %42 = dma.hbm_to_vmem [thread:$0]  %s2, 512, %s40, [#allocation6]
    $region13: #{tpu_custom_call.1} parent=1 // pred_fallthru
      _
    // Predicated region
    $region14: #{tpu_custom_call.1} parent=1 // pred_check
      _
    $region15: #{tpu_custom_call.1} parent=1 // pred_check_branch
      %44 = sbr.rel (0) target = $region17
    $region16: #{tpu_custom_call.1} parent=1 // pred_region
      %45 = dma.done [#allocation3], 128
    $region17: #{tpu_custom_call.1} parent=1 // pred_fallthru
      _
    // Predicated region
    $region18: #{tpu_custom_call.1} parent=1 // pred_check
      _
    $region19: #{tpu_custom_call.1} parent=1 // pred_check_branch
      %47 = sbr.rel (0) target = $region21
    $region20: #{tpu_custom_call.1} parent=1 // pred_region
      %48 = dma.done [#allocation6], 65536
    $region21: #{tpu_custom_call.1} parent=1 // pred_fallthru
      _
    // Predicated region
    $region22: #{tpu_custom_call.1} parent=1 // pred_check
      _
    $region23: #{tpu_custom_call.1} parent=1 // pred_check_branch
      %50 = sbr.rel (0) target = $region25
    $region24: #{tpu_custom_call.1} parent=1 // pred_region
      %51 = dma.done [#allocation6], 512
    $region25: #{tpu_custom_call.1} parent=1 // pred_fallthru
      _
    %v52 = vld [vmem:[#allocation2] sm:$0xff]
    %v53 = vld [vmem:[#allocation5] sm:$0xff]
    %v54 = vld [vmem:[#allocation5 + $0x8] sm:$0xff]
    %v55 = vld [vmem:[#allocation5 + $0x10] sm:$0xff]
    %v56 = vld [vmem:[#allocation5 + $0x18] sm:$0xff]
    %v57 = vld [vmem:[#allocation5 + $0x20] sm:$0xff]
    %v58 = vld [vmem:[#allocation5 + $0x28] sm:$0xff]
    %v59 = vld [vmem:[#allocation5 + $0x30] sm:$0xff]
    %v60 = vld [vmem:[#allocation5 + $0x38] sm:$0xff]
    %v61 = vld [vmem:[#allocation5 + $0x40] sm:$0xff]
    %v62 = vld [vmem:[#allocation5 + $0x48] sm:$0xff]
    %v63 = vld [vmem:[#allocation5 + $0x50] sm:$0xff]
    %v64 = vld [vmem:[#allocation5 + $0x58] sm:$0xff]
    %v65 = vld [vmem:[#allocation5 + $0x60] sm:$0xff]
    %v66 = vld [vmem:[#allocation5 + $0x68] sm:$0xff]
    %v67 = vld [vmem:[#allocation5 + $0x70] sm:$0xff]
    %v68 = vld [vmem:[#allocation5 + $0x78] sm:$0xff]
    %v69 = vld [vmem:[#allocation5 + $0x80] sm:$0xff]
    %v70 = vld [vmem:[#allocation5 + $0x88] sm:$0xff]
    %v71 = vld [vmem:[#allocation5 + $0x90] sm:$0xff]
    %v72 = vld [vmem:[#allocation5 + $0x98] sm:$0xff]
    %v73 = vld [vmem:[#allocation5 + $0xa0] sm:$0xff]
    %v74 = vld [vmem:[#allocation5 + $0xa8] sm:$0xff]
    %v75 = vld [vmem:[#allocation5 + $0xb0] sm:$0xff]
    %v76 = vld [vmem:[#allocation5 + $0xb8] sm:$0xff]
    %v77 = vld [vmem:[#allocation5 + $0xc0] sm:$0xff]
    %v78 = vld [vmem:[#allocation5 + $0xc8] sm:$0xff]
    %v79 = vld [vmem:[#allocation5 + $0xd0] sm:$0xff]
    %v80 = vld [vmem:[#allocation5 + $0xd8] sm:$0xff]
    %v81 = vld [vmem:[#allocation5 + $0xe0] sm:$0xff]
    %v82 = vld [vmem:[#allocation5 + $0xe8] sm:$0xff]
    %v83 = vld [vmem:[#allocation5 + $0xf0] sm:$0xff]
    %v84 = vld [vmem:[#allocation5 + $0xf8] sm:$0xff]
    %v85 = vld [vmem:[#allocation5 + $0x100] sm:$0xff]
    %v86 = vld [vmem:[#allocation5 + $0x108] sm:$0xff]
    %v87 = vld [vmem:[#allocation5 + $0x110] sm:$0xff]
    %v88 = vld [vmem:[#allocation5 + $0x118] sm:$0xff]
    %v89 = vld [vmem:[#allocation5 + $0x120] sm:$0xff]
    %v90 = vld [vmem:[#allocation5 + $0x128] sm:$0xff]
    %v91 = vld [vmem:[#allocation5 + $0x130] sm:$0xff]
    %v92 = vld [vmem:[#allocation5 + $0x138] sm:$0xff]
    %v93 = vld [vmem:[#allocation5 + $0x140] sm:$0xff]
    %v94 = vld [vmem:[#allocation5 + $0x148] sm:$0xff]
    %v95 = vld [vmem:[#allocation5 + $0x150] sm:$0xff]
    %v96 = vld [vmem:[#allocation5 + $0x158] sm:$0xff]
    %v97 = vld [vmem:[#allocation5 + $0x160] sm:$0xff]
    %v98 = vld [vmem:[#allocation5 + $0x168] sm:$0xff]
    %v99 = vld [vmem:[#allocation5 + $0x170] sm:$0xff]
    %v100 = vld [vmem:[#allocation5 + $0x178] sm:$0xff]
    %v101 = vld [vmem:[#allocation5 + $0x180] sm:$0xff]
    %v102 = vld [vmem:[#allocation5 + $0x188] sm:$0xff]
    %v103 = vld [vmem:[#allocation5 + $0x190] sm:$0xff]
    %v104 = vld [vmem:[#allocation5 + $0x198] sm:$0xff]
    %v105 = vld [vmem:[#allocation5 + $0x1a0] sm:$0xff]
    %v106 = vld [vmem:[#allocation5 + $0x1a8] sm:$0xff]
    %v107 = vld [vmem:[#allocation5 + $0x1b0] sm:$0xff]
    %v108 = vld [vmem:[#allocation5 + $0x1b8] sm:$0xff]
    %v109 = vld [vmem:[#allocation5 + $0x1c0] sm:$0xff]
    %v110 = vld [vmem:[#allocation5 + $0x1c8] sm:$0xff]
    %v111 = vld [vmem:[#allocation5 + $0x1d0] sm:$0xff]
    %v112 = vld [vmem:[#allocation5 + $0x1d8] sm:$0xff]
    %v113 = vld [vmem:[#allocation5 + $0x1e0] sm:$0xff]
    %v114 = vld [vmem:[#allocation5 + $0x1e8] sm:$0xff]
    %v115 = vld [vmem:[#allocation5 + $0x1f0] sm:$0xff]
    %v116 = vld [vmem:[#allocation5 + $0x1f8] sm:$0xff]
    %v117 = vld [vmem:[#allocation5 + $0x200] sm:$0xff]
    %v118 = vld [vmem:[#allocation5 + $0x208] sm:$0xff]
    %v119 = vld [vmem:[#allocation5 + $0x210] sm:$0xff]
    %v120 = vld [vmem:[#allocation5 + $0x218] sm:$0xff]
    %v121 = vld [vmem:[#allocation5 + $0x220] sm:$0xff]
    %v122 = vld [vmem:[#allocation5 + $0x228] sm:$0xff]
    %v123 = vld [vmem:[#allocation5 + $0x230] sm:$0xff]
    %v124 = vld [vmem:[#allocation5 + $0x238] sm:$0xff]
    %v125 = vld [vmem:[#allocation5 + $0x240] sm:$0xff]
    %v126 = vld [vmem:[#allocation5 + $0x248] sm:$0xff]
    %v127 = vld [vmem:[#allocation5 + $0x250] sm:$0xff]
    %v128 = vld [vmem:[#allocation5 + $0x258] sm:$0xff]
    %v129 = vld [vmem:[#allocation5 + $0x260] sm:$0xff]
    %v130 = vld [vmem:[#allocation5 + $0x268] sm:$0xff]
    %v131 = vld [vmem:[#allocation5 + $0x270] sm:$0xff]
    %v132 = vld [vmem:[#allocation5 + $0x278] sm:$0xff]
    %v133 = vld [vmem:[#allocation5 + $0x280] sm:$0xff]
    %v134 = vld [vmem:[#allocation5 + $0x288] sm:$0xff]
    %v135 = vld [vmem:[#allocation5 + $0x290] sm:$0xff]
    %v136 = vld [vmem:[#allocation5 + $0x298] sm:$0xff]
    %v137 = vld [vmem:[#allocation5 + $0x2a0] sm:$0xff]
    %v138 = vld [vmem:[#allocation5 + $0x2a8] sm:$0xff]
    %v139 = vld [vmem:[#allocation5 + $0x2b0] sm:$0xff]
    %v140 = vld [vmem:[#allocation5 + $0x2b8] sm:$0xff]
    %v141 = vld [vmem:[#allocation5 + $0x2c0] sm:$0xff]
    %v142 = vld [vmem:[#allocation5 + $0x2c8] sm:$0xff]
    %v143 = vld [vmem:[#allocation5 + $0x2d0] sm:$0xff]
    %v144 = vld [vmem:[#allocation5 + $0x2d8] sm:$0xff]
    %v145 = vld [vmem:[#allocation5 + $0x2e0] sm:$0xff]
    %v146 = vld [vmem:[#allocation5 + $0x2e8] sm:$0xff]
    %v147 = vld [vmem:[#allocation5 + $0x2f0] sm:$0xff]
    %v148 = vld [vmem:[#allocation5 + $0x2f8] sm:$0xff]
    %v149 = vld [vmem:[#allocation5 + $0x300] sm:$0xff]
    %v150 = vld [vmem:[#allocation5 + $0x308] sm:$0xff]
    %v151 = vld [vmem:[#allocation5 + $0x310] sm:$0xff]
    %v152 = vld [vmem:[#allocation5 + $0x318] sm:$0xff]
    %v153 = vld [vmem:[#allocation5 + $0x320] sm:$0xff]
    %v154 = vld [vmem:[#allocation5 + $0x328] sm:$0xff]
    %v155 = vld [vmem:[#allocation5 + $0x330] sm:$0xff]
    %v156 = vld [vmem:[#allocation5 + $0x338] sm:$0xff]
    %v157 = vld [vmem:[#allocation5 + $0x340] sm:$0xff]
    %v158 = vld [vmem:[#allocation5 + $0x348] sm:$0xff]
    %v159 = vld [vmem:[#allocation5 + $0x350] sm:$0xff]
    %v160 = vld [vmem:[#allocation5 + $0x358] sm:$0xff]
    %v161 = vld [vmem:[#allocation5 + $0x360] sm:$0xff]
    %v162 = vld [vmem:[#allocation5 + $0x368] sm:$0xff]
    %v163 = vld [vmem:[#allocation5 + $0x370] sm:$0xff]
    %v164 = vld [vmem:[#allocation5 + $0x378] sm:$0xff]
    %v165 = vld [vmem:[#allocation5 + $0x380] sm:$0xff]
    %v166 = vld [vmem:[#allocation5 + $0x388] sm:$0xff]
    %v167 = vld [vmem:[#allocation5 + $0x390] sm:$0xff]
    %v168 = vld [vmem:[#allocation5 + $0x398] sm:$0xff]
    %v169 = vld [vmem:[#allocation5 + $0x3a0] sm:$0xff]
    %v170 = vld [vmem:[#allocation5 + $0x3a8] sm:$0xff]
    %v171 = vld [vmem:[#allocation5 + $0x3b0] sm:$0xff]
    %v172 = vld [vmem:[#allocation5 + $0x3b8] sm:$0xff]
    %v173 = vld [vmem:[#allocation5 + $0x3c0] sm:$0xff]
    %v174 = vld [vmem:[#allocation5 + $0x3c8] sm:$0xff]
    %v175 = vld [vmem:[#allocation5 + $0x3d0] sm:$0xff]
    %v176 = vld [vmem:[#allocation5 + $0x3d8] sm:$0xff]
    %v177 = vld [vmem:[#allocation5 + $0x3e0] sm:$0xff]
    %v178 = vld [vmem:[#allocation5 + $0x3e8] sm:$0xff]
    %v179 = vld [vmem:[#allocation5 + $0x3f0] sm:$0xff]
    %v180 = vld [vmem:[#allocation5 + $0x3f8] sm:$0xff]
    %v181 = vld [vmem:[#allocation5 + $0x400] sm:$0xff]
    %v182 = vld [vmem:[#allocation5 + $0x408] sm:$0xff]
    %v183 = vld [vmem:[#allocation5 + $0x410] sm:$0xff]
    %v184 = vld [vmem:[#allocation5 + $0x418] sm:$0xff]
    %v185 = vld [vmem:[#allocation5 + $0x420] sm:$0xff]
    %v186 = vld [vmem:[#allocation5 + $0x428] sm:$0xff]
    %v187 = vld [vmem:[#allocation5 + $0x430] sm:$0xff]
    %v188 = vld [vmem:[#allocation5 + $0x438] sm:$0xff]
    %v189 = vld [vmem:[#allocation5 + $0x440] sm:$0xff]
    %v190 = vld [vmem:[#allocation5 + $0x448] sm:$0xff]
    %v191 = vld [vmem:[#allocation5 + $0x450] sm:$0xff]
    %v192 = vld [vmem:[#allocation5 + $0x458] sm:$0xff]
    %v193 = vld [vmem:[#allocation5 + $0x460] sm:$0xff]
    %v194 = vld [vmem:[#allocation5 + $0x468] sm:$0xff]
    %v195 = vld [vmem:[#allocation5 + $0x470] sm:$0xff]
    %v196 = vld [vmem:[#allocation5 + $0x478] sm:$0xff]
    %v197 = vld [vmem:[#allocation5 + $0x480] sm:$0xff]
    %v198 = vld [vmem:[#allocation5 + $0x488] sm:$0xff]
    %v199 = vld [vmem:[#allocation5 + $0x490] sm:$0xff]
    %v200 = vld [vmem:[#allocation5 + $0x498] sm:$0xff]
    %v201 = vld [vmem:[#allocation5 + $0x4a0] sm:$0xff]
    %v202 = vld [vmem:[#allocation5 + $0x4a8] sm:$0xff]
    %v203 = vld [vmem:[#allocation5 + $0x4b0] sm:$0xff]
    %v204 = vld [vmem:[#allocation5 + $0x4b8] sm:$0xff]
    %v205 = vld [vmem:[#allocation5 + $0x4c0] sm:$0xff]
    %v206 = vld [vmem:[#allocation5 + $0x4c8] sm:$0xff]
    %v207 = vld [vmem:[#allocation5 + $0x4d0] sm:$0xff]
    %v208 = vld [vmem:[#allocation5 + $0x4d8] sm:$0xff]
    %v209 = vld [vmem:[#allocation5 + $0x4e0] sm:$0xff]
    %v210 = vld [vmem:[#allocation5 + $0x4e8] sm:$0xff]
    %v211 = vld [vmem:[#allocation5 + $0x4f0] sm:$0xff]
    %v212 = vld [vmem:[#allocation5 + $0x4f8] sm:$0xff]
    %v213 = vld [vmem:[#allocation5 + $0x500] sm:$0xff]
    %v214 = vld [vmem:[#allocation5 + $0x508] sm:$0xff]
    %v215 = vld [vmem:[#allocation5 + $0x510] sm:$0xff]
    %v216 = vld [vmem:[#allocation5 + $0x518] sm:$0xff]
    %v217 = vld [vmem:[#allocation5 + $0x520] sm:$0xff]
    %v218 = vld [vmem:[#allocation5 + $0x528] sm:$0xff]
    %v219 = vld [vmem:[#allocation5 + $0x530] sm:$0xff]
    %v220 = vld [vmem:[#allocation5 + $0x538] sm:$0xff]
    %v221 = vld [vmem:[#allocation5 + $0x540] sm:$0xff]
    %v222 = vld [vmem:[#allocation5 + $0x548] sm:$0xff]
    %v223 = vld [vmem:[#allocation5 + $0x550] sm:$0xff]
    %v224 = vld [vmem:[#allocation5 + $0x558] sm:$0xff]
    %v225 = vld [vmem:[#allocation5 + $0x560] sm:$0xff]
    %v226 = vld [vmem:[#allocation5 + $0x568] sm:$0xff]
    %v227 = vld [vmem:[#allocation5 + $0x570] sm:$0xff]
    %v228 = vld [vmem:[#allocation5 + $0x578] sm:$0xff]
    %v229 = vld [vmem:[#allocation5 + $0x580] sm:$0xff]
    %v230 = vld [vmem:[#allocation5 + $0x588] sm:$0xff]
    %v231 = vld [vmem:[#allocation5 + $0x590] sm:$0xff]
    %v232 = vld [vmem:[#allocation5 + $0x598] sm:$0xff]
    %v233 = vld [vmem:[#allocation5 + $0x5a0] sm:$0xff]
    %v234 = vld [vmem:[#allocation5 + $0x5a8] sm:$0xff]
    %v235 = vld [vmem:[#allocation5 + $0x5b0] sm:$0xff]
    %v236 = vld [vmem:[#allocation5 + $0x5b8] sm:$0xff]
    %v237 = vld [vmem:[#allocation5 + $0x5c0] sm:$0xff]
    %v238 = vld [vmem:[#allocation5 + $0x5c8] sm:$0xff]
    %v239 = vld [vmem:[#allocation5 + $0x5d0] sm:$0xff]
    %v240 = vld [vmem:[#allocation5 + $0x5d8] sm:$0xff]
    %v241 = vld [vmem:[#allocation5 + $0x5e0] sm:$0xff]
    %v242 = vld [vmem:[#allocation5 + $0x5e8] sm:$0xff]
    %v243 = vld [vmem:[#allocation5 + $0x5f0] sm:$0xff]
    %v244 = vld [vmem:[#allocation5 + $0x5f8] sm:$0xff]
    %v245 = vld [vmem:[#allocation5 + $0x600] sm:$0xff]
    %v246 = vld [vmem:[#allocation5 + $0x608] sm:$0xff]
    %v247 = vld [vmem:[#allocation5 + $0x610] sm:$0xff]
    %v248 = vld [vmem:[#allocation5 + $0x618] sm:$0xff]
    %v249 = vld [vmem:[#allocation5 + $0x620] sm:$0xff]
    %v250 = vld [vmem:[#allocation5 + $0x628] sm:$0xff]
    %v251 = vld [vmem:[#allocation5 + $0x630] sm:$0xff]
    %v252 = vld [vmem:[#allocation5 + $0x638] sm:$0xff]
    %v253 = vld [vmem:[#allocation5 + $0x640] sm:$0xff]
    %v254 = vld [vmem:[#allocation5 + $0x648] sm:$0xff]
    %v255 = vld [vmem:[#allocation5 + $0x650] sm:$0xff]
    %v256 = vld [vmem:[#allocation5 + $0x658] sm:$0xff]
    %v257 = vld [vmem:[#allocation5 + $0x660] sm:$0xff]
    %v258 = vld [vmem:[#allocation5 + $0x668] sm:$0xff]
    %v259 = vld [vmem:[#allocation5 + $0x670] sm:$0xff]
    %v260 = vld [vmem:[#allocation5 + $0x678] sm:$0xff]
    %v261 = vld [vmem:[#allocation5 + $0x680] sm:$0xff]
    %v262 = vld [vmem:[#allocation5 + $0x688] sm:$0xff]
    %v263 = vld [vmem:[#allocation5 + $0x690] sm:$0xff]
    %v264 = vld [vmem:[#allocation5 + $0x698] sm:$0xff]
    %v265 = vld [vmem:[#allocation5 + $0x6a0] sm:$0xff]
    %v266 = vld [vmem:[#allocation5 + $0x6a8] sm:$0xff]
    %v267 = vld [vmem:[#allocation5 + $0x6b0] sm:$0xff]
    %v268 = vld [vmem:[#allocation5 + $0x6b8] sm:$0xff]
    %v269 = vld [vmem:[#allocation5 + $0x6c0] sm:$0xff]
    %v270 = vld [vmem:[#allocation5 + $0x6c8] sm:$0xff]
    %v271 = vld [vmem:[#allocation5 + $0x6d0] sm:$0xff]
    %v272 = vld [vmem:[#allocation5 + $0x6d8] sm:$0xff]
    %v273 = vld [vmem:[#allocation5 + $0x6e0] sm:$0xff]
    %v274 = vld [vmem:[#allocation5 + $0x6e8] sm:$0xff]
    %v275 = vld [vmem:[#allocation5 + $0x6f0] sm:$0xff]
    %v276 = vld [vmem:[#allocation5 + $0x6f8] sm:$0xff]
    %v277 = vld [vmem:[#allocation5 + $0x700] sm:$0xff]
    %v278 = vld [vmem:[#allocation5 + $0x708] sm:$0xff]
    %v279 = vld [vmem:[#allocation5 + $0x710] sm:$0xff]
    %v280 = vld [vmem:[#allocation5 + $0x718] sm:$0xff]
    %v281 = vld [vmem:[#allocation5 + $0x720] sm:$0xff]
    %v282 = vld [vmem:[#allocation5 + $0x728] sm:$0xff]
    %v283 = vld [vmem:[#allocation5 + $0x730] sm:$0xff]
    %v284 = vld [vmem:[#allocation5 + $0x738] sm:$0xff]
    %v285 = vld [vmem:[#allocation5 + $0x740] sm:$0xff]
    %v286 = vld [vmem:[#allocation5 + $0x748] sm:$0xff]
    %v287 = vld [vmem:[#allocation5 + $0x750] sm:$0xff]
    %v288 = vld [vmem:[#allocation5 + $0x758] sm:$0xff]
    %v289 = vld [vmem:[#allocation5 + $0x760] sm:$0xff]
    %v290 = vld [vmem:[#allocation5 + $0x768] sm:$0xff]
    %v291 = vld [vmem:[#allocation5 + $0x770] sm:$0xff]
    %v292 = vld [vmem:[#allocation5 + $0x778] sm:$0xff]
    %v293 = vld [vmem:[#allocation5 + $0x780] sm:$0xff]
    %v294 = vld [vmem:[#allocation5 + $0x788] sm:$0xff]
    %v295 = vld [vmem:[#allocation5 + $0x790] sm:$0xff]
    %v296 = vld [vmem:[#allocation5 + $0x798] sm:$0xff]
    %v297 = vld [vmem:[#allocation5 + $0x7a0] sm:$0xff]
    %v298 = vld [vmem:[#allocation5 + $0x7a8] sm:$0xff]
    %v299 = vld [vmem:[#allocation5 + $0x7b0] sm:$0xff]
    %v300 = vld [vmem:[#allocation5 + $0x7b8] sm:$0xff]
    %v301 = vld [vmem:[#allocation5 + $0x7c0] sm:$0xff]
    %v302 = vld [vmem:[#allocation5 + $0x7c8] sm:$0xff]
    %v303 = vld [vmem:[#allocation5 + $0x7d0] sm:$0xff]
    %v304 = vld [vmem:[#allocation5 + $0x7d8] sm:$0xff]
    %v305 = vld [vmem:[#allocation5 + $0x7e0] sm:$0xff]
    %v306 = vld [vmem:[#allocation5 + $0x7e8] sm:$0xff]
    %v307 = vld [vmem:[#allocation5 + $0x7f0] sm:$0xff]
    %v308 = vld [vmem:[#allocation5 + $0x7f8] sm:$0xff]
    %v309 = vld [vmem:[#allocation5 + $0x800] sm:$0xff]
    %v310 = vld [vmem:[#allocation5 + $0x808] sm:$0xff]
    %v311 = vld [vmem:[#allocation5 + $0x810] sm:$0xff]
    %v312 = vld [vmem:[#allocation5 + $0x818] sm:$0xff]
    %v313 = vld [vmem:[#allocation5 + $0x820] sm:$0xff]
    %v314 = vld [vmem:[#allocation5 + $0x828] sm:$0xff]
    %v315 = vld [vmem:[#allocation5 + $0x830] sm:$0xff]
    %v316 = vld [vmem:[#allocation5 + $0x838] sm:$0xff]
    %v317 = vld [vmem:[#allocation5 + $0x840] sm:$0xff]
    %v318 = vld [vmem:[#allocation5 + $0x848] sm:$0xff]
    %v319 = vld [vmem:[#allocation5 + $0x850] sm:$0xff]
    %v320 = vld [vmem:[#allocation5 + $0x858] sm:$0xff]
    %v321 = vld [vmem:[#allocation5 + $0x860] sm:$0xff]
    %v322 = vld [vmem:[#allocation5 + $0x868] sm:$0xff]
    %v323 = vld [vmem:[#allocation5 + $0x870] sm:$0xff]
    %v324 = vld [vmem:[#allocation5 + $0x878] sm:$0xff]
    %v325 = vld [vmem:[#allocation5 + $0x880] sm:$0xff]
    %v326 = vld [vmem:[#allocation5 + $0x888] sm:$0xff]
    %v327 = vld [vmem:[#allocation5 + $0x890] sm:$0xff]
    %v328 = vld [vmem:[#allocation5 + $0x898] sm:$0xff]
    %v329 = vld [vmem:[#allocation5 + $0x8a0] sm:$0xff]
    %v330 = vld [vmem:[#allocation5 + $0x8a8] sm:$0xff]
    %v331 = vld [vmem:[#allocation5 + $0x8b0] sm:$0xff]
    %v332 = vld [vmem:[#allocation5 + $0x8b8] sm:$0xff]
    %v333 = vld [vmem:[#allocation5 + $0x8c0] sm:$0xff]
    %v334 = vld [vmem:[#allocation5 + $0x8c8] sm:$0xff]
    %v335 = vld [vmem:[#allocation5 + $0x8d0] sm:$0xff]
    %v336 = vld [vmem:[#allocation5 + $0x8d8] sm:$0xff]
    %v337 = vld [vmem:[#allocation5 + $0x8e0] sm:$0xff]
    %v338 = vld [vmem:[#allocation5 + $0x8e8] sm:$0xff]
    %v339 = vld [vmem:[#allocation5 + $0x8f0] sm:$0xff]
    %v340 = vld [vmem:[#allocation5 + $0x8f8] sm:$0xff]
    %v341 = vld [vmem:[#allocation5 + $0x900] sm:$0xff]
    %v342 = vld [vmem:[#allocation5 + $0x908] sm:$0xff]
    %v343 = vld [vmem:[#allocation5 + $0x910] sm:$0xff]
    %v344 = vld [vmem:[#allocation5 + $0x918] sm:$0xff]
    %v345 = vld [vmem:[#allocation5 + $0x920] sm:$0xff]
    %v346 = vld [vmem:[#allocation5 + $0x928] sm:$0xff]
    %v347 = vld [vmem:[#allocation5 + $0x930] sm:$0xff]
    %v348 = vld [vmem:[#allocation5 + $0x938] sm:$0xff]
    %v349 = vld [vmem:[#allocation5 + $0x940] sm:$0xff]
    %v350 = vld [vmem:[#allocation5 + $0x948] sm:$0xff]
    %v351 = vld [vmem:[#allocation5 + $0x950] sm:$0xff]
    %v352 = vld [vmem:[#allocation5 + $0x958] sm:$0xff]
    %v353 = vld [vmem:[#allocation5 + $0x960] sm:$0xff]
    %v354 = vld [vmem:[#allocation5 + $0x968] sm:$0xff]
    %v355 = vld [vmem:[#allocation5 + $0x970] sm:$0xff]
    %v356 = vld [vmem:[#allocation5 + $0x978] sm:$0xff]
    %v357 = vld [vmem:[#allocation5 + $0x980] sm:$0xff]
    %v358 = vld [vmem:[#allocation5 + $0x988] sm:$0xff]
    %v359 = vld [vmem:[#allocation5 + $0x990] sm:$0xff]
    %v360 = vld [vmem:[#allocation5 + $0x998] sm:$0xff]
    %v361 = vld [vmem:[#allocation5 + $0x9a0] sm:$0xff]
    %v362 = vld [vmem:[#allocation5 + $0x9a8] sm:$0xff]
    %v363 = vld [vmem:[#allocation5 + $0x9b0] sm:$0xff]
    %v364 = vld [vmem:[#allocation5 + $0x9b8] sm:$0xff]
    %v365 = vld [vmem:[#allocation5 + $0x9c0] sm:$0xff]
    %v366 = vld [vmem:[#allocation5 + $0x9c8] sm:$0xff]
    %v367 = vld [vmem:[#allocation5 + $0x9d0] sm:$0xff]
    %v368 = vld [vmem:[#allocation5 + $0x9d8] sm:$0xff]
    %v369 = vld [vmem:[#allocation5 + $0x9e0] sm:$0xff]
    %v370 = vld [vmem:[#allocation5 + $0x9e8] sm:$0xff]
    %v371 = vld [vmem:[#allocation5 + $0x9f0] sm:$0xff]
    %v372 = vld [vmem:[#allocation5 + $0x9f8] sm:$0xff]
    %v373 = vld [vmem:[#allocation5 + $0xa00] sm:$0xff]
    %v374 = vld [vmem:[#allocation5 + $0xa08] sm:$0xff]
    %v375 = vld [vmem:[#allocation5 + $0xa10] sm:$0xff]
    %v376 = vld [vmem:[#allocation5 + $0xa18] sm:$0xff]
    %v377 = vld [vmem:[#allocation5 + $0xa20] sm:$0xff]
    %v378 = vld [vmem:[#allocation5 + $0xa28] sm:$0xff]
    %v379 = vld [vmem:[#allocation5 + $0xa30] sm:$0xff]
    %v380 = vld [vmem:[#allocation5 + $0xa38] sm:$0xff]
    %v381 = vld [vmem:[#allocation5 + $0xa40] sm:$0xff]
    %v382 = vld [vmem:[#allocation5 + $0xa48] sm:$0xff]
    %v383 = vld [vmem:[#allocation5 + $0xa50] sm:$0xff]
    %v384 = vld [vmem:[#allocation5 + $0xa58] sm:$0xff]
    %v385 = vld [vmem:[#allocation5 + $0xa60] sm:$0xff]
    %v386 = vld [vmem:[#allocation5 + $0xa68] sm:$0xff]
    %v387 = vld [vmem:[#allocation5 + $0xa70] sm:$0xff]
    %v388 = vld [vmem:[#allocation5 + $0xa78] sm:$0xff]
    %v389 = vld [vmem:[#allocation5 + $0xa80] sm:$0xff]
    %v390 = vld [vmem:[#allocation5 + $0xa88] sm:$0xff]
    %v391 = vld [vmem:[#allocation5 + $0xa90] sm:$0xff]
    %v392 = vld [vmem:[#allocation5 + $0xa98] sm:$0xff]
    %v393 = vld [vmem:[#allocation5 + $0xaa0] sm:$0xff]
    %v394 = vld [vmem:[#allocation5 + $0xaa8] sm:$0xff]
    %v395 = vld [vmem:[#allocation5 + $0xab0] sm:$0xff]
    %v396 = vld [vmem:[#allocation5 + $0xab8] sm:$0xff]
    %v397 = vld [vmem:[#allocation5 + $0xac0] sm:$0xff]
    %v398 = vld [vmem:[#allocation5 + $0xac8] sm:$0xff]
    %v399 = vld [vmem:[#allocation5 + $0xad0] sm:$0xff]
    %v400 = vld [vmem:[#allocation5 + $0xad8] sm:$0xff]
    %v401 = vld [vmem:[#allocation5 + $0xae0] sm:$0xff]
    %v402 = vld [vmem:[#allocation5 + $0xae8] sm:$0xff]
    %v403 = vld [vmem:[#allocation5 + $0xaf0] sm:$0xff]
    %v404 = vld [vmem:[#allocation5 + $0xaf8] sm:$0xff]
    %v405 = vld [vmem:[#allocation5 + $0xb00] sm:$0xff]
    %v406 = vld [vmem:[#allocation5 + $0xb08] sm:$0xff]
    %v407 = vld [vmem:[#allocation5 + $0xb10] sm:$0xff]
    %v408 = vld [vmem:[#allocation5 + $0xb18] sm:$0xff]
    %v409 = vld [vmem:[#allocation5 + $0xb20] sm:$0xff]
    %v410 = vld [vmem:[#allocation5 + $0xb28] sm:$0xff]
    %v411 = vld [vmem:[#allocation5 + $0xb30] sm:$0xff]
    %v412 = vld [vmem:[#allocation5 + $0xb38] sm:$0xff]
    %v413 = vld [vmem:[#allocation5 + $0xb40] sm:$0xff]
    %v414 = vld [vmem:[#allocation5 + $0xb48] sm:$0xff]
    %v415 = vld [vmem:[#allocation5 + $0xb50] sm:$0xff]
    %v416 = vld [vmem:[#allocation5 + $0xb58] sm:$0xff]
    %v417 = vld [vmem:[#allocation5 + $0xb60] sm:$0xff]
    %v418 = vld [vmem:[#allocation5 + $0xb68] sm:$0xff]
    %v419 = vld [vmem:[#allocation5 + $0xb70] sm:$0xff]
    %v420 = vld [vmem:[#allocation5 + $0xb78] sm:$0xff]
    %v421 = vld [vmem:[#allocation5 + $0xb80] sm:$0xff]
    %v422 = vld [vmem:[#allocation5 + $0xb88] sm:$0xff]
    %v423 = vld [vmem:[#allocation5 + $0xb90] sm:$0xff]
    %v424 = vld [vmem:[#allocation5 + $0xb98] sm:$0xff]
    %v425 = vld [vmem:[#allocation5 + $0xba0] sm:$0xff]
    %v426 = vld [vmem:[#allocation5 + $0xba8] sm:$0xff]
    %v427 = vld [vmem:[#allocation5 + $0xbb0] sm:$0xff]
    %v428 = vld [vmem:[#allocation5 + $0xbb8] sm:$0xff]
    %v429 = vld [vmem:[#allocation5 + $0xbc0] sm:$0xff]
    %v430 = vld [vmem:[#allocation5 + $0xbc8] sm:$0xff]
    %v431 = vld [vmem:[#allocation5 + $0xbd0] sm:$0xff]
    %v432 = vld [vmem:[#allocation5 + $0xbd8] sm:$0xff]
    %v433 = vld [vmem:[#allocation5 + $0xbe0] sm:$0xff]
    %v434 = vld [vmem:[#allocation5 + $0xbe8] sm:$0xff]
    %v435 = vld [vmem:[#allocation5 + $0xbf0] sm:$0xff]
    %v436 = vld [vmem:[#allocation5 + $0xbf8] sm:$0xff]
    %v437 = vld [vmem:[#allocation5 + $0xc00] sm:$0xff]
    %v438 = vld [vmem:[#allocation5 + $0xc08] sm:$0xff]
    %v439 = vld [vmem:[#allocation5 + $0xc10] sm:$0xff]
    %v440 = vld [vmem:[#allocation5 + $0xc18] sm:$0xff]
    %v441 = vld [vmem:[#allocation5 + $0xc20] sm:$0xff]
    %v442 = vld [vmem:[#allocation5 + $0xc28] sm:$0xff]
    %v443 = vld [vmem:[#allocation5 + $0xc30] sm:$0xff]
    %v444 = vld [vmem:[#allocation5 + $0xc38] sm:$0xff]
    %v445 = vld [vmem:[#allocation5 + $0xc40] sm:$0xff]
    %v446 = vld [vmem:[#allocation5 + $0xc48] sm:$0xff]
    %v447 = vld [vmem:[#allocation5 + $0xc50] sm:$0xff]
    %v448 = vld [vmem:[#allocation5 + $0xc58] sm:$0xff]
    %v449 = vld [vmem:[#allocation5 + $0xc60] sm:$0xff]
    %v450 = vld [vmem:[#allocation5 + $0xc68] sm:$0xff]
    %v451 = vld [vmem:[#allocation5 + $0xc70] sm:$0xff]
    %v452 = vld [vmem:[#allocation5 + $0xc78] sm:$0xff]
    %v453 = vld [vmem:[#allocation5 + $0xc80] sm:$0xff]
    %v454 = vld [vmem:[#allocation5 + $0xc88] sm:$0xff]
    %v455 = vld [vmem:[#allocation5 + $0xc90] sm:$0xff]
    %v456 = vld [vmem:[#allocation5 + $0xc98] sm:$0xff]
    %v457 = vld [vmem:[#allocation5 + $0xca0] sm:$0xff]
    %v458 = vld [vmem:[#allocation5 + $0xca8] sm:$0xff]
    %v459 = vld [vmem:[#allocation5 + $0xcb0] sm:$0xff]
    %v460 = vld [vmem:[#allocation5 + $0xcb8] sm:$0xff]
    %v461 = vld [vmem:[#allocation5 + $0xcc0] sm:$0xff]
    %v462 = vld [vmem:[#allocation5 + $0xcc8] sm:$0xff]
    %v463 = vld [vmem:[#allocation5 + $0xcd0] sm:$0xff]
    %v464 = vld [vmem:[#allocation5 + $0xcd8] sm:$0xff]
    %v465 = vld [vmem:[#allocation5 + $0xce0] sm:$0xff]
    %v466 = vld [vmem:[#allocation5 + $0xce8] sm:$0xff]
    %v467 = vld [vmem:[#allocation5 + $0xcf0] sm:$0xff]
    %v468 = vld [vmem:[#allocation5 + $0xcf8] sm:$0xff]
    %v469 = vld [vmem:[#allocation5 + $0xd00] sm:$0xff]
    %v470 = vld [vmem:[#allocation5 + $0xd08] sm:$0xff]
    %v471 = vld [vmem:[#allocation5 + $0xd10] sm:$0xff]
    %v472 = vld [vmem:[#allocation5 + $0xd18] sm:$0xff]
    %v473 = vld [vmem:[#allocation5 + $0xd20] sm:$0xff]
    %v474 = vld [vmem:[#allocation5 + $0xd28] sm:$0xff]
    %v475 = vld [vmem:[#allocation5 + $0xd30] sm:$0xff]
    %v476 = vld [vmem:[#allocation5 + $0xd38] sm:$0xff]
    %v477 = vld [vmem:[#allocation5 + $0xd40] sm:$0xff]
    %v478 = vld [vmem:[#allocation5 + $0xd48] sm:$0xff]
    %v479 = vld [vmem:[#allocation5 + $0xd50] sm:$0xff]
    %v480 = vld [vmem:[#allocation5 + $0xd58] sm:$0xff]
    %v481 = vld [vmem:[#allocation5 + $0xd60] sm:$0xff]
    %v482 = vld [vmem:[#allocation5 + $0xd68] sm:$0xff]
    %v483 = vld [vmem:[#allocation5 + $0xd70] sm:$0xff]
    %v484 = vld [vmem:[#allocation5 + $0xd78] sm:$0xff]
    %v485 = vld [vmem:[#allocation5 + $0xd80] sm:$0xff]
    %v486 = vld [vmem:[#allocation5 + $0xd88] sm:$0xff]
    %v487 = vld [vmem:[#allocation5 + $0xd90] sm:$0xff]
    %v488 = vld [vmem:[#allocation5 + $0xd98] sm:$0xff]
    %v489 = vld [vmem:[#allocation5 + $0xda0] sm:$0xff]
    %v490 = vld [vmem:[#allocation5 + $0xda8] sm:$0xff]
    %v491 = vld [vmem:[#allocation5 + $0xdb0] sm:$0xff]
    %v492 = vld [vmem:[#allocation5 + $0xdb8] sm:$0xff]
    %v493 = vld [vmem:[#allocation5 + $0xdc0] sm:$0xff]
    %v494 = vld [vmem:[#allocation5 + $0xdc8] sm:$0xff]
    %v495 = vld [vmem:[#allocation5 + $0xdd0] sm:$0xff]
    %v496 = vld [vmem:[#allocation5 + $0xdd8] sm:$0xff]
    %v497 = vld [vmem:[#allocation5 + $0xde0] sm:$0xff]
    %v498 = vld [vmem:[#allocation5 + $0xde8] sm:$0xff]
    %v499 = vld [vmem:[#allocation5 + $0xdf0] sm:$0xff]
    %v500 = vld [vmem:[#allocation5 + $0xdf8] sm:$0xff]
    %v501 = vld [vmem:[#allocation5 + $0xe00] sm:$0xff]
    %v502 = vld [vmem:[#allocation5 + $0xe08] sm:$0xff]
    %v503 = vld [vmem:[#allocation5 + $0xe10] sm:$0xff]
    %v504 = vld [vmem:[#allocation5 + $0xe18] sm:$0xff]
    %v505 = vld [vmem:[#allocation5 + $0xe20] sm:$0xff]
    %v506 = vld [vmem:[#allocation5 + $0xe28] sm:$0xff]
    %v507 = vld [vmem:[#allocation5 + $0xe30] sm:$0xff]
    %v508 = vld [vmem:[#allocation5 + $0xe38] sm:$0xff]
    %v509 = vld [vmem:[#allocation5 + $0xe40] sm:$0xff]
    %v510 = vld [vmem:[#allocation5 + $0xe48] sm:$0xff]
    %v511 = vld [vmem:[#allocation5 + $0xe50] sm:$0xff]
    %v512 = vld [vmem:[#allocation5 + $0xe58] sm:$0xff]
    %v513 = vld [vmem:[#allocation5 + $0xe60] sm:$0xff]
    %v514 = vld [vmem:[#allocation5 + $0xe68] sm:$0xff]
    %v515 = vld [vmem:[#allocation5 + $0xe70] sm:$0xff]
    %v516 = vld [vmem:[#allocation5 + $0xe78] sm:$0xff]
    %v517 = vld [vmem:[#allocation5 + $0xe80] sm:$0xff]
    %v518 = vld [vmem:[#allocation5 + $0xe88] sm:$0xff]
    %v519 = vld [vmem:[#allocation5 + $0xe90] sm:$0xff]
    %v520 = vld [vmem:[#allocation5 + $0xe98] sm:$0xff]
    %v521 = vld [vmem:[#allocation5 + $0xea0] sm:$0xff]
    %v522 = vld [vmem:[#allocation5 + $0xea8] sm:$0xff]
    %v523 = vld [vmem:[#allocation5 + $0xeb0] sm:$0xff]
    %v524 = vld [vmem:[#allocation5 + $0xeb8] sm:$0xff]
    %v525 = vld [vmem:[#allocation5 + $0xec0] sm:$0xff]
    %v526 = vld [vmem:[#allocation5 + $0xec8] sm:$0xff]
    %v527 = vld [vmem:[#allocation5 + $0xed0] sm:$0xff]
    %v528 = vld [vmem:[#allocation5 + $0xed8] sm:$0xff]
    %v529 = vld [vmem:[#allocation5 + $0xee0] sm:$0xff]
    %v530 = vld [vmem:[#allocation5 + $0xee8] sm:$0xff]
    %v531 = vld [vmem:[#allocation5 + $0xef0] sm:$0xff]
    %v532 = vld [vmem:[#allocation5 + $0xef8] sm:$0xff]
    %v533 = vld [vmem:[#allocation5 + $0xf00] sm:$0xff]
    %v534 = vld [vmem:[#allocation5 + $0xf08] sm:$0xff]
    %v535 = vld [vmem:[#allocation5 + $0xf10] sm:$0xff]
    %v536 = vld [vmem:[#allocation5 + $0xf18] sm:$0xff]
    %v537 = vld [vmem:[#allocation5 + $0xf20] sm:$0xff]
    %v538 = vld [vmem:[#allocation5 + $0xf28] sm:$0xff]
    %v539 = vld [vmem:[#allocation5 + $0xf30] sm:$0xff]
    %v540 = vld [vmem:[#allocation5 + $0xf38] sm:$0xff]
    %v541 = vld [vmem:[#allocation5 + $0xf40] sm:$0xff]
    %v542 = vld [vmem:[#allocation5 + $0xf48] sm:$0xff]
    %v543 = vld [vmem:[#allocation5 + $0xf50] sm:$0xff]
    %v544 = vld [vmem:[#allocation5 + $0xf58] sm:$0xff]
    %v545 = vld [vmem:[#allocation5 + $0xf60] sm:$0xff]
    %v546 = vld [vmem:[#allocation5 + $0xf68] sm:$0xff]
    %v547 = vld [vmem:[#allocation5 + $0xf70] sm:$0xff]
    %v548 = vld [vmem:[#allocation5 + $0xf78] sm:$0xff]
    %v549 = vld [vmem:[#allocation5 + $0xf80] sm:$0xff]
    %v550 = vld [vmem:[#allocation5 + $0xf88] sm:$0xff]
    %v551 = vld [vmem:[#allocation5 + $0xf90] sm:$0xff]
    %v552 = vld [vmem:[#allocation5 + $0xf98] sm:$0xff]
    %v553 = vld [vmem:[#allocation5 + $0xfa0] sm:$0xff]
    %v554 = vld [vmem:[#allocation5 + $0xfa8] sm:$0xff]
    %v555 = vld [vmem:[#allocation5 + $0xfb0] sm:$0xff]
    %v556 = vld [vmem:[#allocation5 + $0xfb8] sm:$0xff]
    %v557 = vld [vmem:[#allocation5 + $0xfc0] sm:$0xff]
    %v558 = vld [vmem:[#allocation5 + $0xfc8] sm:$0xff]
    %v559 = vld [vmem:[#allocation5 + $0xfd0] sm:$0xff]
    %v560 = vld [vmem:[#allocation5 + $0xfd8] sm:$0xff]
    %v561 = vld [vmem:[#allocation5 + $0xfe0] sm:$0xff]
    %v562 = vld [vmem:[#allocation5 + $0xfe8] sm:$0xff]
    %v563 = vld [vmem:[#allocation5 + $0xff0] sm:$0xff]
    %v564 = vld [vmem:[#allocation5 + $0xff8] sm:$0xff]
    %v565 = vld [vmem:[#allocation7] sm:$0xff]
    %v566 = vld [vmem:[#allocation7 + $0x8] sm:$0xff]
    %v567 = vld [vmem:[#allocation7 + $0x10] sm:$0xff]
    %v568 = vld [vmem:[#allocation7 + $0x18] sm:$0xff]
    %v573 = vlaneseq
    %v574 = vshrl.u32 %v573, 7
    %v575 = vsub.s32 0, %v574
    %v576 = vrot.slane %v565, %v575
    %v577 = vlaneseq
    %v578 = vshrl.u32 %v577, 7
    %v579 = vsub.s32 1, %v578
    %v580 = vrot.slane %v565, %v579
    %v581 = vlaneseq
    %v582 = vshrl.u32 %v581, 7
    %v583 = vsub.s32 2, %v582
    %v584 = vrot.slane %v565, %v583
    %v585 = vlaneseq
    %v586 = vshrl.u32 %v585, 7
    %v587 = vsub.s32 3, %v586
    %v588 = vrot.slane %v565, %v587
    %v589 = vlaneseq
    %v590 = vshrl.u32 %v589, 7
    %v591 = vsub.s32 4, %v590
    %v592 = vrot.slane %v565, %v591
    %v593 = vlaneseq
    %v594 = vshrl.u32 %v593, 7
    %v595 = vsub.s32 5, %v594
    %v596 = vrot.slane %v565, %v595
    %v597 = vlaneseq
    %v598 = vshrl.u32 %v597, 7
    %v599 = vsub.s32 6, %v598
    %v600 = vrot.slane %v565, %v599
    %v601 = vlaneseq
    %v602 = vshrl.u32 %v601, 7
    %v603 = vsub.s32 7, %v602
    %v604 = vrot.slane %v565, %v603
    %v605 = vlaneseq
    %v606 = vshrl.u32 %v605, 7
    %v607 = vsub.s32 0, %v606
    %v608 = vrot.slane %v566, %v607
    %v609 = vlaneseq
    %v610 = vshrl.u32 %v609, 7
    %v611 = vsub.s32 1, %v610
    %v612 = vrot.slane %v566, %v611
    %v613 = vlaneseq
    %v614 = vshrl.u32 %v613, 7
    %v615 = vsub.s32 2, %v614
    %v616 = vrot.slane %v566, %v615
    %v617 = vlaneseq
    %v618 = vshrl.u32 %v617, 7
    %v619 = vsub.s32 3, %v618
    %v620 = vrot.slane %v566, %v619
    %v621 = vlaneseq
    %v622 = vshrl.u32 %v621, 7
    %v623 = vsub.s32 4, %v622
    %v624 = vrot.slane %v566, %v623
    %v625 = vlaneseq
    %v626 = vshrl.u32 %v625, 7
    %v627 = vsub.s32 5, %v626
    %v628 = vrot.slane %v566, %v627
    %v629 = vlaneseq
    %v630 = vshrl.u32 %v629, 7
    %v631 = vsub.s32 6, %v630
    %v632 = vrot.slane %v566, %v631
    %v633 = vlaneseq
    %v634 = vshrl.u32 %v633, 7
    %v635 = vsub.s32 7, %v634
    %v636 = vrot.slane %v566, %v635
    %v637 = vlaneseq
    %v638 = vshrl.u32 %v637, 7
    %v639 = vsub.s32 0, %v638
    %v640 = vrot.slane %v567, %v639
    %v641 = vlaneseq
    %v642 = vshrl.u32 %v641, 7
    %v643 = vsub.s32 1, %v642
    %v644 = vrot.slane %v567, %v643
    %v645 = vlaneseq
    %v646 = vshrl.u32 %v645, 7
    %v647 = vsub.s32 2, %v646
    %v648 = vrot.slane %v567, %v647
    %v649 = vlaneseq
    %v650 = vshrl.u32 %v649, 7
    %v651 = vsub.s32 3, %v650
    %v652 = vrot.slane %v567, %v651
    %v653 = vlaneseq
    %v654 = vshrl.u32 %v653, 7
    %v655 = vsub.s32 4, %v654
    %v656 = vrot.slane %v567, %v655
    %v657 = vlaneseq
    %v658 = vshrl.u32 %v657, 7
    %v659 = vsub.s32 5, %v658
    %v660 = vrot.slane %v567, %v659
    %v661 = vlaneseq
    %v662 = vshrl.u32 %v661, 7
    %v663 = vsub.s32 6, %v662
    %v664 = vrot.slane %v567, %v663
    %v665 = vlaneseq
    %v666 = vshrl.u32 %v665, 7
    %v667 = vsub.s32 7, %v666
    %v668 = vrot.slane %v567, %v667
    %v669 = vlaneseq
    %v670 = vshrl.u32 %v669, 7
    %v671 = vsub.s32 0, %v670
    %v672 = vrot.slane %v568, %v671
    %v673 = vlaneseq
    %v674 = vshrl.u32 %v673, 7
    %v675 = vsub.s32 1, %v674
    %v676 = vrot.slane %v568, %v675
    %v677 = vlaneseq
    %v678 = vshrl.u32 %v677, 7
    %v679 = vsub.s32 2, %v678
    %v680 = vrot.slane %v568, %v679
    %v681 = vlaneseq
    %v682 = vshrl.u32 %v681, 7
    %v683 = vsub.s32 3, %v682
    %v684 = vrot.slane %v568, %v683
    %v685 = vlaneseq
    %v686 = vshrl.u32 %v685, 7
    %v687 = vsub.s32 4, %v686
    %v688 = vrot.slane %v568, %v687
    %v689 = vlaneseq
    %v690 = vshrl.u32 %v689, 7
    %v691 = vsub.s32 5, %v690
    %v692 = vrot.slane %v568, %v691
    %v693 = vlaneseq
    %v694 = vshrl.u32 %v693, 7
    %v695 = vsub.s32 6, %v694
    %v696 = vrot.slane %v568, %v695
    %v697 = vlaneseq
    %v698 = vshrl.u32 %v697, 7
    %v699 = vsub.s32 7, %v698
    %v700 = vrot.slane %v568, %v699
    %733 = vmatprep.subr.mxu0 %v534
    %734 = vmatpush1.msra.mxu0 %v533
    %735 = vmatprep.subr.mxu0 %v502
    %736 = vmatpush1.msra.mxu0 %v501
    %737 = vmatprep.subr.mxu0 %v470
    %738 = vmatpush1.msra.mxu0 %v469
    %739 = vmatprep.subr.mxu0 %v438
    %740 = vmatpush1.msra.mxu0 %v437
    %741 = vmatprep.subr.mxu0 %v406
    %742 = vmatpush1.msra.mxu0 %v405
    %743 = vmatprep.subr.mxu0 %v374
    %744 = vmatpush1.msra.mxu0 %v373
    %745 = vmatprep.subr.mxu0 %v342
    %746 = vmatpush1.msra.mxu0 %v341
    %747 = vmatprep.subr.mxu0 %v310
    %748 = vmatpush1.msra.mxu0 %v309
    %749 = vmatprep.subr.mxu0 %v278
    %750 = vmatpush1.msra.mxu0 %v277
    %751 = vmatprep.subr.mxu0 %v246
    %752 = vmatpush1.msra.mxu0 %v245
    %753 = vmatprep.subr.mxu0 %v214
    %754 = vmatpush1.msra.mxu0 %v213
    %755 = vmatprep.subr.mxu0 %v182
    %756 = vmatpush1.msra.mxu0 %v181
    %757 = vmatprep.subr.mxu0 %v150
    %758 = vmatpush1.msra.mxu0 %v149
    %759 = vmatprep.subr.mxu0 %v118
    %760 = vmatpush1.msra.mxu0 %v117
    %761 = vmatprep.subr.mxu0 %v86
    %762 = vmatpush1.msra.mxu0 %v85
    %763 = vmatprep.subr.mxu0 %v54
    %764 = vmatpush1.msra.mxu0 %v53
    %765 = vmatprep.subr.mxu0 0.0
    %766 = vmatpush2.msra.mxu0 0.0
    %767 = vmatprep.subr.mxu0 0.0
    %768 = vmatpush2.msra.mxu0 0.0
    %769 = vmatprep.subr.mxu0 0.0
    %770 = vmatpush2.msra.mxu0 0.0
    %771 = vmatprep.subr.mxu0 0.0
    %772 = vmatpush2.msra.mxu0 0.0
    %773 = vmatprep.subr.mxu0 0.0
    %774 = vmatpush2.msra.mxu0 0.0
    %775 = vmatprep.subr.mxu0 0.0
    %776 = vmatpush2.msra.mxu0 0.0
    %777 = vmatprep.subr.mxu0 0.0
    %778 = vmatpush2.msra.mxu0 0.0
    %779 = vmatprep.subr.mxu0 0.0
    %780 = vmatpush2.msra.mxu0 0.0
    %781 = vmatprep.subr.mxu0 0.0
    %782 = vmatpush2.msra.mxu0 0.0
    %783 = vmatprep.subr.mxu0 0.0
    %784 = vmatpush2.msra.mxu0 0.0
    %785 = vmatprep.subr.mxu0 0.0
    %786 = vmatpush2.msra.mxu0 0.0
    %787 = vmatprep.subr.mxu0 0.0
    %788 = vmatpush2.msra.mxu0 0.0
    %789 = vmatprep.subr.mxu0 0.0
    %790 = vmatpush2.msra.mxu0 0.0
    %791 = vmatprep.subr.mxu0 0.0
    %792 = vmatpush2.msra.mxu0 0.0
    %793 = vmatprep.subr.mxu0 0.0
    %794 = vmatpush2.msra.mxu0 0.0
    %795 = vmatprep.subr.mxu0 0.0
    %796 = vmatpush2.msra.mxu0 0.0
    %797 = vmatprep.mubr.f32.mxu0 0.0
    %798 = vmatmul.mubr.f32.gmra.mxu0 %v52
    %v799 = vpop.f32.mrf.mxu0
    %v800 = vadd.f32 %v576, %v799
    %v801 = vpop.f32.mrf.mxu0
    %v802 = vadd.f32 %v580, %v801
    %803 = vdwg.mxu0
    %804 = vmatprep.subr.mxu0 %v536
    %805 = vmatpush1.msra.mxu0 %v535
    %806 = vmatprep.subr.mxu0 %v504
    %807 = vmatpush1.msra.mxu0 %v503
    %808 = vmatprep.subr.mxu0 %v472
    %809 = vmatpush1.msra.mxu0 %v471
    %810 = vmatprep.subr.mxu0 %v440
    %811 = vmatpush1.msra.mxu0 %v439
    %812 = vmatprep.subr.mxu0 %v408
    %813 = vmatpush1.msra.mxu0 %v407
    %814 = vmatprep.subr.mxu0 %v376
    %815 = vmatpush1.msra.mxu0 %v375
    %816 = vmatprep.subr.mxu0 %v344
    %817 = vmatpush1.msra.mxu0 %v343
    %818 = vmatprep.subr.mxu0 %v312
    %819 = vmatpush1.msra.mxu0 %v311
    %820 = vmatprep.subr.mxu0 %v280
    %821 = vmatpush1.msra.mxu0 %v279
    %822 = vmatprep.subr.mxu0 %v248
    %823 = vmatpush1.msra.mxu0 %v247
    %824 = vmatprep.subr.mxu0 %v216
    %825 = vmatpush1.msra.mxu0 %v215
    %826 = vmatprep.subr.mxu0 %v184
    %827 = vmatpush1.msra.mxu0 %v183
    %828 = vmatprep.subr.mxu0 %v152
    %829 = vmatpush1.msra.mxu0 %v151
    %830 = vmatprep.subr.mxu0 %v120
    %831 = vmatpush1.msra.mxu0 %v119
    %832 = vmatprep.subr.mxu0 %v88
    %833 = vmatpush1.msra.mxu0 %v87
    %834 = vmatprep.subr.mxu0 %v56
    %835 = vmatpush1.msra.mxu0 %v55
    %836 = vmatprep.subr.mxu0 0.0
    %837 = vmatpush2.msra.mxu0 0.0
    %838 = vmatprep.subr.mxu0 0.0
    %839 = vmatpush2.msra.mxu0 0.0
    %840 = vmatprep.subr.mxu0 0.0
    %841 = vmatpush2.msra.mxu0 0.0
    %842 = vmatprep.subr.mxu0 0.0
    %843 = vmatpush2.msra.mxu0 0.0
    %844 = vmatprep.subr.mxu0 0.0
    %845 = vmatpush2.msra.mxu0 0.0
    %846 = vmatprep.subr.mxu0 0.0
    %847 = vmatpush2.msra.mxu0 0.0
    %848 = vmatprep.subr.mxu0 0.0
    %849 = vmatpush2.msra.mxu0 0.0
    %850 = vmatprep.subr.mxu0 0.0
    %851 = vmatpush2.msra.mxu0 0.0
    %852 = vmatprep.subr.mxu0 0.0
    %853 = vmatpush2.msra.mxu0 0.0
    %854 = vmatprep.subr.mxu0 0.0
    %855 = vmatpush2.msra.mxu0 0.0
    %856 = vmatprep.subr.mxu0 0.0
    %857 = vmatpush2.msra.mxu0 0.0
    %858 = vmatprep.subr.mxu0 0.0
    %859 = vmatpush2.msra.mxu0 0.0
    %860 = vmatprep.subr.mxu0 0.0
    %861 = vmatpush2.msra.mxu0 0.0
    %862 = vmatprep.subr.mxu0 0.0
    %863 = vmatpush2.msra.mxu0 0.0
    %864 = vmatprep.subr.mxu0 0.0
    %865 = vmatpush2.msra.mxu0 0.0
    %866 = vmatprep.subr.mxu0 0.0
    %867 = vmatpush2.msra.mxu0 0.0
    %868 = vmatprep.mubr.f32.mxu0 0.0
    %869 = vmatmul.mubr.f32.gmra.mxu0 %v52
    %v870 = vpop.f32.mrf.mxu0
    %v871 = vadd.f32 %v584, %v870
    %v872 = vpop.f32.mrf.mxu0
    %v873 = vadd.f32 %v588, %v872
    %874 = vdwg.mxu0
    %875 = vmatprep.subr.mxu0 %v538
    %876 = vmatpush1.msra.mxu0 %v537
    %877 = vmatprep.subr.mxu0 %v506
    %878 = vmatpush1.msra.mxu0 %v505
    %879 = vmatprep.subr.mxu0 %v474
    %880 = vmatpush1.msra.mxu0 %v473
    %881 = vmatprep.subr.mxu0 %v442
    %882 = vmatpush1.msra.mxu0 %v441
    %883 = vmatprep.subr.mxu0 %v410
    %884 = vmatpush1.msra.mxu0 %v409
    %885 = vmatprep.subr.mxu0 %v378
    %886 = vmatpush1.msra.mxu0 %v377
    %887 = vmatprep.subr.mxu0 %v346
    %888 = vmatpush1.msra.mxu0 %v345
    %889 = vmatprep.subr.mxu0 %v314
    %890 = vmatpush1.msra.mxu0 %v313
    %891 = vmatprep.subr.mxu0 %v282
    %892 = vmatpush1.msra.mxu0 %v281
    %893 = vmatprep.subr.mxu0 %v250
    %894 = vmatpush1.msra.mxu0 %v249
    %895 = vmatprep.subr.mxu0 %v218
    %896 = vmatpush1.msra.mxu0 %v217
    %897 = vmatprep.subr.mxu0 %v186
    %898 = vmatpush1.msra.mxu0 %v185
    %899 = vmatprep.subr.mxu0 %v154
    %900 = vmatpush1.msra.mxu0 %v153
    %901 = vmatprep.subr.mxu0 %v122
    %902 = vmatpush1.msra.mxu0 %v121
    %903 = vmatprep.subr.mxu0 %v90
    %904 = vmatpush1.msra.mxu0 %v89
    %905 = vmatprep.subr.mxu0 %v58
    %906 = vmatpush1.msra.mxu0 %v57
    %907 = vmatprep.subr.mxu0 0.0
    %908 = vmatpush2.msra.mxu0 0.0
    %909 = vmatprep.subr.mxu0 0.0
    %910 = vmatpush2.msra.mxu0 0.0
    %911 = vmatprep.subr.mxu0 0.0
    %912 = vmatpush2.msra.mxu0 0.0
    %913 = vmatprep.subr.mxu0 0.0
    %914 = vmatpush2.msra.mxu0 0.0
    %915 = vmatprep.subr.mxu0 0.0
    %916 = vmatpush2.msra.mxu0 0.0
    %917 = vmatprep.subr.mxu0 0.0
    %918 = vmatpush2.msra.mxu0 0.0
    %919 = vmatprep.subr.mxu0 0.0
    %920 = vmatpush2.msra.mxu0 0.0
    %921 = vmatprep.subr.mxu0 0.0
    %922 = vmatpush2.msra.mxu0 0.0
    %923 = vmatprep.subr.mxu0 0.0
    %924 = vmatpush2.msra.mxu0 0.0
    %925 = vmatprep.subr.mxu0 0.0
    %926 = vmatpush2.msra.mxu0 0.0
    %927 = vmatprep.subr.mxu0 0.0
    %928 = vmatpush2.msra.mxu0 0.0
    %929 = vmatprep.subr.mxu0 0.0
    %930 = vmatpush2.msra.mxu0 0.0
    %931 = vmatprep.subr.mxu0 0.0
    %932 = vmatpush2.msra.mxu0 0.0
    %933 = vmatprep.subr.mxu0 0.0
    %934 = vmatpush2.msra.mxu0 0.0
    %935 = vmatprep.subr.mxu0 0.0
    %936 = vmatpush2.msra.mxu0 0.0
    %937 = vmatprep.subr.mxu0 0.0
    %938 = vmatpush2.msra.mxu0 0.0
    %939 = vmatprep.mubr.f32.mxu0 0.0
    %940 = vmatmul.mubr.f32.gmra.mxu0 %v52
    %v941 = vpop.f32.mrf.mxu0
    %v942 = vadd.f32 %v592, %v941
    %v943 = vpop.f32.mrf.mxu0
    %v944 = vadd.f32 %v596, %v943
    %945 = vdwg.mxu0
    %946 = vmatprep.subr.mxu0 %v540
    %947 = vmatpush1.msra.mxu0 %v539
    %948 = vmatprep.subr.mxu0 %v508
    %949 = vmatpush1.msra.mxu0 %v507
    %950 = vmatprep.subr.mxu0 %v476
    %951 = vmatpush1.msra.mxu0 %v475
    %952 = vmatprep.subr.mxu0 %v444
    %953 = vmatpush1.msra.mxu0 %v443
    %954 = vmatprep.subr.mxu0 %v412
    %955 = vmatpush1.msra.mxu0 %v411
    %956 = vmatprep.subr.mxu0 %v380
    %957 = vmatpush1.msra.mxu0 %v379
    %958 = vmatprep.subr.mxu0 %v348
    %959 = vmatpush1.msra.mxu0 %v347
    %960 = vmatprep.subr.mxu0 %v316
    %961 = vmatpush1.msra.mxu0 %v315
    %962 = vmatprep.subr.mxu0 %v284
    %963 = vmatpush1.msra.mxu0 %v283
    %964 = vmatprep.subr.mxu0 %v252
    %965 = vmatpush1.msra.mxu0 %v251
    %966 = vmatprep.subr.mxu0 %v220
    %967 = vmatpush1.msra.mxu0 %v219
    %968 = vmatprep.subr.mxu0 %v188
    %969 = vmatpush1.msra.mxu0 %v187
    %970 = vmatprep.subr.mxu0 %v156
    %971 = vmatpush1.msra.mxu0 %v155
    %972 = vmatprep.subr.mxu0 %v124
    %973 = vmatpush1.msra.mxu0 %v123
    %974 = vmatprep.subr.mxu0 %v92
    %975 = vmatpush1.msra.mxu0 %v91
    %976 = vmatprep.subr.mxu0 %v60
    %977 = vmatpush1.msra.mxu0 %v59
    %978 = vmatprep.subr.mxu0 0.0
    %979 = vmatpush2.msra.mxu0 0.0
    %980 = vmatprep.subr.mxu0 0.0
    %981 = vmatpush2.msra.mxu0 0.0
    %982 = vmatprep.subr.mxu0 0.0
    %983 = vmatpush2.msra.mxu0 0.0
    %984 = vmatprep.subr.mxu0 0.0
    %985 = vmatpush2.msra.mxu0 0.0
    %986 = vmatprep.subr.mxu0 0.0
    %987 = vmatpush2.msra.mxu0 0.0
    %988 = vmatprep.subr.mxu0 0.0
    %989 = vmatpush2.msra.mxu0 0.0
    %990 = vmatprep.subr.mxu0 0.0
    %991 = vmatpush2.msra.mxu0 0.0
    %992 = vmatprep.subr.mxu0 0.0
    %993 = vmatpush2.msra.mxu0 0.0
    %994 = vmatprep.subr.mxu0 0.0
    %995 = vmatpush2.msra.mxu0 0.0
    %996 = vmatprep.subr.mxu0 0.0
    %997 = vmatpush2.msra.mxu0 0.0
    %998 = vmatprep.subr.mxu0 0.0
    %999 = vmatpush2.msra.mxu0 0.0
    %1000 = vmatprep.subr.mxu0 0.0
    %1001 = vmatpush2.msra.mxu0 0.0
    %1002 = vmatprep.subr.mxu0 0.0
    %1003 = vmatpush2.msra.mxu0 0.0
    %1004 = vmatprep.subr.mxu0 0.0
    %1005 = vmatpush2.msra.mxu0 0.0
    %1006 = vmatprep.subr.mxu0 0.0
    %1007 = vmatpush2.msra.mxu0 0.0
    %1008 = vmatprep.subr.mxu0 0.0
    %1009 = vmatpush2.msra.mxu0 0.0
    %1010 = vmatprep.mubr.f32.mxu0 0.0
    %1011 = vmatmul.mubr.f32.gmra.mxu0 %v52
    %v1012 = vpop.f32.mrf.mxu0
    %v1013 = vadd.f32 %v600, %v1012
    %v1014 = vpop.f32.mrf.mxu0
    %v1015 = vadd.f32 %v604, %v1014
    %1016 = vdwg.mxu0
    %1017 = vmatprep.subr.mxu0 %v542
    %1018 = vmatpush1.msra.mxu0 %v541
    %1019 = vmatprep.subr.mxu0 %v510
    %1020 = vmatpush1.msra.mxu0 %v509
    %1021 = vmatprep.subr.mxu0 %v478
    %1022 = vmatpush1.msra.mxu0 %v477
    %1023 = vmatprep.subr.mxu0 %v446
    %1024 = vmatpush1.msra.mxu0 %v445
    %1025 = vmatprep.subr.mxu0 %v414
    %1026 = vmatpush1.msra.mxu0 %v413
    %1027 = vmatprep.subr.mxu0 %v382
    %1028 = vmatpush1.msra.mxu0 %v381
    %1029 = vmatprep.subr.mxu0 %v350
    %1030 = vmatpush1.msra.mxu0 %v349
    %1031 = vmatprep.subr.mxu0 %v318
    %1032 = vmatpush1.msra.mxu0 %v317
    %1033 = vmatprep.subr.mxu0 %v286
    %1034 = vmatpush1.msra.mxu0 %v285
    %1035 = vmatprep.subr.mxu0 %v254
    %1036 = vmatpush1.msra.mxu0 %v253
    %1037 = vmatprep.subr.mxu0 %v222
    %1038 = vmatpush1.msra.mxu0 %v221
    %1039 = vmatprep.subr.mxu0 %v190
    %1040 = vmatpush1.msra.mxu0 %v189
    %1041 = vmatprep.subr.mxu0 %v158
    %1042 = vmatpush1.msra.mxu0 %v157
    %1043 = vmatprep.subr.mxu0 %v126
    %1044 = vmatpush1.msra.mxu0 %v125
    %1045 = vmatprep.subr.mxu0 %v94
    %1046 = vmatpush1.msra.mxu0 %v93
    %1047 = vmatprep.subr.mxu0 %v62
    %1048 = vmatpush1.msra.mxu0 %v61
    %1049 = vmatprep.subr.mxu0 0.0
    %1050 = vmatpush2.msra.mxu0 0.0
    %1051 = vmatprep.subr.mxu0 0.0
    %1052 = vmatpush2.msra.mxu0 0.0
    %1053 = vmatprep.subr.mxu0 0.0
    %1054 = vmatpush2.msra.mxu0 0.0
    %1055 = vmatprep.subr.mxu0 0.0
    %1056 = vmatpush2.msra.mxu0 0.0
    %1057 = vmatprep.subr.mxu0 0.0
    %1058 = vmatpush2.msra.mxu0 0.0
    %1059 = vmatprep.subr.mxu0 0.0
    %1060 = vmatpush2.msra.mxu0 0.0
    %1061 = vmatprep.subr.mxu0 0.0
    %1062 = vmatpush2.msra.mxu0 0.0
    %1063 = vmatprep.subr.mxu0 0.0
    %1064 = vmatpush2.msra.mxu0 0.0
    %1065 = vmatprep.subr.mxu0 0.0
    %1066 = vmatpush2.msra.mxu0 0.0
    %1067 = vmatprep.subr.mxu0 0.0
    %1068 = vmatpush2.msra.mxu0 0.0
    %1069 = vmatprep.subr.mxu0 0.0
    %1070 = vmatpush2.msra.mxu0 0.0
    %1071 = vmatprep.subr.mxu0 0.0
    %1072 = vmatpush2.msra.mxu0 0.0
    %1073 = vmatprep.subr.mxu0 0.0
    %1074 = vmatpush2.msra.mxu0 0.0
    %1075 = vmatprep.subr.mxu0 0.0
    %1076 = vmatpush2.msra.mxu0 0.0
    %1077 = vmatprep.subr.mxu0 0.0
    %1078 = vmatpush2.msra.mxu0 0.0
    %1079 = vmatprep.subr.mxu0 0.0
    %1080 = vmatpush2.msra.mxu0 0.0
    %1081 = vmatprep.mubr.f32.mxu0 0.0
    %1082 = vmatmul.mubr.f32.gmra.mxu0 %v52
    %v1083 = vpop.f32.mrf.mxu0
    %v1084 = vadd.f32 %v608, %v1083
    %v1085 = vpop.f32.mrf.mxu0
    %v1086 = vadd.f32 %v612, %v1085
    %1087 = vdwg.mxu0
    %1088 = vmatprep.subr.mxu0 %v544
    %1089 = vmatpush1.msra.mxu0 %v543
    %1090 = vmatprep.subr.mxu0 %v512
    %1091 = vmatpush1.msra.mxu0 %v511
    %1092 = vmatprep.subr.mxu0 %v480
    %1093 = vmatpush1.msra.mxu0 %v479
    %1094 = vmatprep.subr.mxu0 %v448
    %1095 = vmatpush1.msra.mxu0 %v447
    %1096 = vmatprep.subr.mxu0 %v416
    %1097 = vmatpush1.msra.mxu0 %v415
    %1098 = vmatprep.subr.mxu0 %v384
    %1099 = vmatpush1.msra.mxu0 %v383
    %1100 = vmatprep.subr.mxu0 %v352
    %1101 = vmatpush1.msra.mxu0 %v351
    %1102 = vmatprep.subr.mxu0 %v320
    %1103 = vmatpush1.msra.mxu0 %v319
    %1104 = vmatprep.subr.mxu0 %v288
    %1105 = vmatpush1.msra.mxu0 %v287
    %1106 = vmatprep.subr.mxu0 %v256
    %1107 = vmatpush1.msra.mxu0 %v255
    %1108 = vmatprep.subr.mxu0 %v224
    %1109 = vmatpush1.msra.mxu0 %v223
    %1110 = vmatprep.subr.mxu0 %v192
    %1111 = vmatpush1.msra.mxu0 %v191
    %1112 = vmatprep.subr.mxu0 %v160
    %1113 = vmatpush1.msra.mxu0 %v159
    %1114 = vmatprep.subr.mxu0 %v128
    %1115 = vmatpush1.msra.mxu0 %v127
    %1116 = vmatprep.subr.mxu0 %v96
    %1117 = vmatpush1.msra.mxu0 %v95
    %1118 = vmatprep.subr.mxu0 %v64
    %1119 = vmatpush1.msra.mxu0 %v63
    %1120 = vmatprep.subr.mxu0 0.0
    %1121 = vmatpush2.msra.mxu0 0.0
    %1122 = vmatprep.subr.mxu0 0.0
    %1123 = vmatpush2.msra.mxu0 0.0
    %1124 = vmatprep.subr.mxu0 0.0
    %1125 = vmatpush2.msra.mxu0 0.0
    %1126 = vmatprep.subr.mxu0 0.0
    %1127 = vmatpush2.msra.mxu0 0.0
    %1128 = vmatprep.subr.mxu0 0.0
    %1129 = vmatpush2.msra.mxu0 0.0
    %1130 = vmatprep.subr.mxu0 0.0
    %1131 = vmatpush2.msra.mxu0 0.0
    %1132 = vmatprep.subr.mxu0 0.0
    %1133 = vmatpush2.msra.mxu0 0.0
    %1134 = vmatprep.subr.mxu0 0.0
    %1135 = vmatpush2.msra.mxu0 0.0
    %1136 = vmatprep.subr.mxu0 0.0
    %1137 = vmatpush2.msra.mxu0 0.0
    %1138 = vmatprep.subr.mxu0 0.0
    %1139 = vmatpush2.msra.mxu0 0.0
    %1140 = vmatprep.subr.mxu0 0.0
    %1141 = vmatpush2.msra.mxu0 0.0
    %1142 = vmatprep.subr.mxu0 0.0
    %1143 = vmatpush2.msra.mxu0 0.0
    %1144 = vmatprep.subr.mxu0 0.0
    %1145 = vmatpush2.msra.mxu0 0.0
    %1146 = vmatprep.subr.mxu0 0.0
    %1147 = vmatpush2.msra.mxu0 0.0
    %1148 = vmatprep.subr.mxu0 0.0
    %1149 = vmatpush2.msra.mxu0 0.0
    %1150 = vmatprep.subr.mxu0 0.0
    %1151 = vmatpush2.msra.mxu0 0.0
    %1152 = vmatprep.mubr.f32.mxu0 0.0
    %1153 = vmatmul.mubr.f32.gmra.mxu0 %v52
    %v1154 = vpop.f32.mrf.mxu0
    %v1155 = vadd.f32 %v616, %v1154
    %v1156 = vpop.f32.mrf.mxu0
    %v1157 = vadd.f32 %v620, %v1156
    %1158 = vdwg.mxu0
    %1159 = vmatprep.subr.mxu0 %v546
    %1160 = vmatpush1.msra.mxu0 %v545
    %1161 = vmatprep.subr.mxu0 %v514
    %1162 = vmatpush1.msra.mxu0 %v513
    %1163 = vmatprep.subr.mxu0 %v482
    %1164 = vmatpush1.msra.mxu0 %v481
    %1165 = vmatprep.subr.mxu0 %v450
    %1166 = vmatpush1.msra.mxu0 %v449
    %1167 = vmatprep.subr.mxu0 %v418
    %1168 = vmatpush1.msra.mxu0 %v417
    %1169 = vmatprep.subr.mxu0 %v386
    %1170 = vmatpush1.msra.mxu0 %v385
    %1171 = vmatprep.subr.mxu0 %v354
    %1172 = vmatpush1.msra.mxu0 %v353
    %1173 = vmatprep.subr.mxu0 %v322
    %1174 = vmatpush1.msra.mxu0 %v321
    %1175 = vmatprep.subr.mxu0 %v290
    %1176 = vmatpush1.msra.mxu0 %v289
    %1177 = vmatprep.subr.mxu0 %v258
    %1178 = vmatpush1.msra.mxu0 %v257
    %1179 = vmatprep.subr.mxu0 %v226
    %1180 = vmatpush1.msra.mxu0 %v225
    %1181 = vmatprep.subr.mxu0 %v194
    %1182 = vmatpush1.msra.mxu0 %v193
    %1183 = vmatprep.subr.mxu0 %v162
    %1184 = vmatpush1.msra.mxu0 %v161
    %1185 = vmatprep.subr.mxu0 %v130
    %1186 = vmatpush1.msra.mxu0 %v129
    %1187 = vmatprep.subr.mxu0 %v98
    %1188 = vmatpush1.msra.mxu0 %v97
    %1189 = vmatprep.subr.mxu0 %v66
    %1190 = vmatpush1.msra.mxu0 %v65
    %1191 = vmatprep.subr.mxu0 0.0
    %1192 = vmatpush2.msra.mxu0 0.0
    %1193 = vmatprep.subr.mxu0 0.0
    %1194 = vmatpush2.msra.mxu0 0.0
    %1195 = vmatprep.subr.mxu0 0.0
    %1196 = vmatpush2.msra.mxu0 0.0
    %1197 = vmatprep.subr.mxu0 0.0
    %1198 = vmatpush2.msra.mxu0 0.0
    %1199 = vmatprep.subr.mxu0 0.0
    %1200 = vmatpush2.msra.mxu0 0.0
    %1201 = vmatprep.subr.mxu0 0.0
    %1202 = vmatpush2.msra.mxu0 0.0
    %1203 = vmatprep.subr.mxu0 0.0
    %1204 = vmatpush2.msra.mxu0 0.0
    %1205 = vmatprep.subr.mxu0 0.0
    %1206 = vmatpush2.msra.mxu0 0.0
    %1207 = vmatprep.subr.mxu0 0.0
    %1208 = vmatpush2.msra.mxu0 0.0
    %1209 = vmatprep.subr.mxu0 0.0
    %1210 = vmatpush2.msra.mxu0 0.0
    %1211 = vmatprep.subr.mxu0 0.0
    %1212 = vmatpush2.msra.mxu0 0.0
    %1213 = vmatprep.subr.mxu0 0.0
    %1214 = vmatpush2.msra.mxu0 0.0
    %1215 = vmatprep.subr.mxu0 0.0
    %1216 = vmatpush2.msra.mxu0 0.0
    %1217 = vmatprep.subr.mxu0 0.0
    %1218 = vmatpush2.msra.mxu0 0.0
    %1219 = vmatprep.subr.mxu0 0.0
    %1220 = vmatpush2.msra.mxu0 0.0
    %1221 = vmatprep.subr.mxu0 0.0
    %1222 = vmatpush2.msra.mxu0 0.0
    %1223 = vmatprep.mubr.f32.mxu0 0.0
    %1224 = vmatmul.mubr.f32.gmra.mxu0 %v52
    %v1225 = vpop.f32.mrf.mxu0
    %v1226 = vadd.f32 %v624, %v1225
    %v1227 = vpop.f32.mrf.mxu0
    %v1228 = vadd.f32 %v628, %v1227
    %1229 = vdwg.mxu0
    %1230 = vmatprep.subr.mxu0 %v548
    %1231 = vmatpush1.msra.mxu0 %v547
    %1232 = vmatprep.subr.mxu0 %v516
    %1233 = vmatpush1.msra.mxu0 %v515
    %1234 = vmatprep.subr.mxu0 %v484
    %1235 = vmatpush1.msra.mxu0 %v483
    %1236 = vmatprep.subr.mxu0 %v452
    %1237 = vmatpush1.msra.mxu0 %v451
    %1238 = vmatprep.subr.mxu0 %v420
    %1239 = vmatpush1.msra.mxu0 %v419
    %1240 = vmatprep.subr.mxu0 %v388
    %1241 = vmatpush1.msra.mxu0 %v387
    %1242 = vmatprep.subr.mxu0 %v356
    %1243 = vmatpush1.msra.mxu0 %v355
    %1244 = vmatprep.subr.mxu0 %v324
    %1245 = vmatpush1.msra.mxu0 %v323
    %1246 = vmatprep.subr.mxu0 %v292
    %1247 = vmatpush1.msra.mxu0 %v291
    %1248 = vmatprep.subr.mxu0 %v260
    %1249 = vmatpush1.msra.mxu0 %v259
    %1250 = vmatprep.subr.mxu0 %v228
    %1251 = vmatpush1.msra.mxu0 %v227
    %1252 = vmatprep.subr.mxu0 %v196
    %1253 = vmatpush1.msra.mxu0 %v195
    %1254 = vmatprep.subr.mxu0 %v164
    %1255 = vmatpush1.msra.mxu0 %v163
    %1256 = vmatprep.subr.mxu0 %v132
    %1257 = vmatpush1.msra.mxu0 %v131
    %1258 = vmatprep.subr.mxu0 %v100
    %1259 = vmatpush1.msra.mxu0 %v99
    %1260 = vmatprep.subr.mxu0 %v68
    %1261 = vmatpush1.msra.mxu0 %v67
    %1262 = vmatprep.subr.mxu0 0.0
    %1263 = vmatpush2.msra.mxu0 0.0
    %1264 = vmatprep.subr.mxu0 0.0
    %1265 = vmatpush2.msra.mxu0 0.0
    %1266 = vmatprep.subr.mxu0 0.0
    %1267 = vmatpush2.msra.mxu0 0.0
    %1268 = vmatprep.subr.mxu0 0.0
    %1269 = vmatpush2.msra.mxu0 0.0
    %1270 = vmatprep.subr.mxu0 0.0
    %1271 = vmatpush2.msra.mxu0 0.0
    %1272 = vmatprep.subr.mxu0 0.0
    %1273 = vmatpush2.msra.mxu0 0.0
    %1274 = vmatprep.subr.mxu0 0.0
    %1275 = vmatpush2.msra.mxu0 0.0
    %1276 = vmatprep.subr.mxu0 0.0
    %1277 = vmatpush2.msra.mxu0 0.0
    %1278 = vmatprep.subr.mxu0 0.0
    %1279 = vmatpush2.msra.mxu0 0.0
    %1280 = vmatprep.subr.mxu0 0.0
    %1281 = vmatpush2.msra.mxu0 0.0
    %1282 = vmatprep.subr.mxu0 0.0
    %1283 = vmatpush2.msra.mxu0 0.0
    %1284 = vmatprep.subr.mxu0 0.0
    %1285 = vmatpush2.msra.mxu0 0.0
    %1286 = vmatprep.subr.mxu0 0.0
    %1287 = vmatpush2.msra.mxu0 0.0
    %1288 = vmatprep.subr.mxu0 0.0
    %1289 = vmatpush2.msra.mxu0 0.0
    %1290 = vmatprep.subr.mxu0 0.0
    %1291 = vmatpush2.msra.mxu0 0.0
    %1292 = vmatprep.subr.mxu0 0.0
    %1293 = vmatpush2.msra.mxu0 0.0
    %1294 = vmatprep.mubr.f32.mxu0 0.0
    %1295 = vmatmul.mubr.f32.gmra.mxu0 %v52
    %v1296 = vpop.f32.mrf.mxu0
    %v1297 = vadd.f32 %v632, %v1296
    %v1298 = vpop.f32.mrf.mxu0
    %v1299 = vadd.f32 %v636, %v1298
    %1300 = vdwg.mxu0
    %1301 = vmatprep.subr.mxu0 %v550
    %1302 = vmatpush1.msra.mxu0 %v549
    %1303 = vmatprep.subr.mxu0 %v518
    %1304 = vmatpush1.msra.mxu0 %v517
    %1305 = vmatprep.subr.mxu0 %v486
    %1306 = vmatpush1.msra.mxu0 %v485
    %1307 = vmatprep.subr.mxu0 %v454
    %1308 = vmatpush1.msra.mxu0 %v453
    %1309 = vmatprep.subr.mxu0 %v422
    %1310 = vmatpush1.msra.mxu0 %v421
    %1311 = vmatprep.subr.mxu0 %v390
    %1312 = vmatpush1.msra.mxu0 %v389
    %1313 = vmatprep.subr.mxu0 %v358
    %1314 = vmatpush1.msra.mxu0 %v357
    %1315 = vmatprep.subr.mxu0 %v326
    %1316 = vmatpush1.msra.mxu0 %v325
    %1317 = vmatprep.subr.mxu0 %v294
    %1318 = vmatpush1.msra.mxu0 %v293
    %1319 = vmatprep.subr.mxu0 %v262
    %1320 = vmatpush1.msra.mxu0 %v261
    %1321 = vmatprep.subr.mxu0 %v230
    %1322 = vmatpush1.msra.mxu0 %v229
    %1323 = vmatprep.subr.mxu0 %v198
    %1324 = vmatpush1.msra.mxu0 %v197
    %1325 = vmatprep.subr.mxu0 %v166
    %1326 = vmatpush1.msra.mxu0 %v165
    %1327 = vmatprep.subr.mxu0 %v134
    %1328 = vmatpush1.msra.mxu0 %v133
    %1329 = vmatprep.subr.mxu0 %v102
    %1330 = vmatpush1.msra.mxu0 %v101
    %1331 = vmatprep.subr.mxu0 %v70
    %1332 = vmatpush1.msra.mxu0 %v69
    %1333 = vmatprep.subr.mxu0 0.0
    %1334 = vmatpush2.msra.mxu0 0.0
    %1335 = vmatprep.subr.mxu0 0.0
    %1336 = vmatpush2.msra.mxu0 0.0
    %1337 = vmatprep.subr.mxu0 0.0
    %1338 = vmatpush2.msra.mxu0 0.0
    %1339 = vmatprep.subr.mxu0 0.0
    %1340 = vmatpush2.msra.mxu0 0.0
    %1341 = vmatprep.subr.mxu0 0.0
    %1342 = vmatpush2.msra.mxu0 0.0
    %1343 = vmatprep.subr.mxu0 0.0
    %1344 = vmatpush2.msra.mxu0 0.0
    %1345 = vmatprep.subr.mxu0 0.0
    %1346 = vmatpush2.msra.mxu0 0.0
    %1347 = vmatprep.subr.mxu0 0.0
    %1348 = vmatpush2.msra.mxu0 0.0
    %1349 = vmatprep.subr.mxu0 0.0
    %1350 = vmatpush2.msra.mxu0 0.0
    %1351 = vmatprep.subr.mxu0 0.0
    %1352 = vmatpush2.msra.mxu0 0.0
    %1353 = vmatprep.subr.mxu0 0.0
    %1354 = vmatpush2.msra.mxu0 0.0
    %1355 = vmatprep.subr.mxu0 0.0
    %1356 = vmatpush2.msra.mxu0 0.0
    %1357 = vmatprep.subr.mxu0 0.0
    %1358 = vmatpush2.msra.mxu0 0.0
    %1359 = vmatprep.subr.mxu0 0.0
    %1360 = vmatpush2.msra.mxu0 0.0
    %1361 = vmatprep.subr.mxu0 0.0
    %1362 = vmatpush2.msra.mxu0 0.0
    %1363 = vmatprep.subr.mxu0 0.0
    %1364 = vmatpush2.msra.mxu0 0.0
    %1365 = vmatprep.mubr.f32.mxu0 0.0
    %1366 = vmatmul.mubr.f32.gmra.mxu0 %v52
    %v1367 = vpop.f32.mrf.mxu0
    %v1368 = vadd.f32 %v640, %v1367
    %v1369 = vpop.f32.mrf.mxu0
    %v1370 = vadd.f32 %v644, %v1369
    %1371 = vdwg.mxu0
    %1372 = vmatprep.subr.mxu0 %v552
    %1373 = vmatpush1.msra.mxu0 %v551
    %1374 = vmatprep.subr.mxu0 %v520
    %1375 = vmatpush1.msra.mxu0 %v519
    %1376 = vmatprep.subr.mxu0 %v488
    %1377 = vmatpush1.msra.mxu0 %v487
    %1378 = vmatprep.subr.mxu0 %v456
    %1379 = vmatpush1.msra.mxu0 %v455
    %1380 = vmatprep.subr.mxu0 %v424
    %1381 = vmatpush1.msra.mxu0 %v423
    %1382 = vmatprep.subr.mxu0 %v392
    %1383 = vmatpush1.msra.mxu0 %v391
    %1384 = vmatprep.subr.mxu0 %v360
    %1385 = vmatpush1.msra.mxu0 %v359
    %1386 = vmatprep.subr.mxu0 %v328
    %1387 = vmatpush1.msra.mxu0 %v327
    %1388 = vmatprep.subr.mxu0 %v296
    %1389 = vmatpush1.msra.mxu0 %v295
    %1390 = vmatprep.subr.mxu0 %v264
    %1391 = vmatpush1.msra.mxu0 %v263
    %1392 = vmatprep.subr.mxu0 %v232
    %1393 = vmatpush1.msra.mxu0 %v231
    %1394 = vmatprep.subr.mxu0 %v200
    %1395 = vmatpush1.msra.mxu0 %v199
    %1396 = vmatprep.subr.mxu0 %v168
    %1397 = vmatpush1.msra.mxu0 %v167
    %1398 = vmatprep.subr.mxu0 %v136
    %1399 = vmatpush1.msra.mxu0 %v135
    %1400 = vmatprep.subr.mxu0 %v104
    %1401 = vmatpush1.msra.mxu0 %v103
    %1402 = vmatprep.subr.mxu0 %v72
    %1403 = vmatpush1.msra.mxu0 %v71
    %1404 = vmatprep.subr.mxu0 0.0
    %1405 = vmatpush2.msra.mxu0 0.0
    %1406 = vmatprep.subr.mxu0 0.0
    %1407 = vmatpush2.msra.mxu0 0.0
    %1408 = vmatprep.subr.mxu0 0.0
    %1409 = vmatpush2.msra.mxu0 0.0
    %1410 = vmatprep.subr.mxu0 0.0
    %1411 = vmatpush2.msra.mxu0 0.0
    %1412 = vmatprep.subr.mxu0 0.0
    %1413 = vmatpush2.msra.mxu0 0.0
    %1414 = vmatprep.subr.mxu0 0.0
    %1415 = vmatpush2.msra.mxu0 0.0
    %1416 = vmatprep.subr.mxu0 0.0
    %1417 = vmatpush2.msra.mxu0 0.0
    %1418 = vmatprep.subr.mxu0 0.0
    %1419 = vmatpush2.msra.mxu0 0.0
    %1420 = vmatprep.subr.mxu0 0.0
    %1421 = vmatpush2.msra.mxu0 0.0
    %1422 = vmatprep.subr.mxu0 0.0
    %1423 = vmatpush2.msra.mxu0 0.0
    %1424 = vmatprep.subr.mxu0 0.0
    %1425 = vmatpush2.msra.mxu0 0.0
    %1426 = vmatprep.subr.mxu0 0.0
    %1427 = vmatpush2.msra.mxu0 0.0
    %1428 = vmatprep.subr.mxu0 0.0
    %1429 = vmatpush2.msra.mxu0 0.0
    %1430 = vmatprep.subr.mxu0 0.0
    %1431 = vmatpush2.msra.mxu0 0.0
    %1432 = vmatprep.subr.mxu0 0.0
    %1433 = vmatpush2.msra.mxu0 0.0
    %1434 = vmatprep.subr.mxu0 0.0
    %1435 = vmatpush2.msra.mxu0 0.0
    %1436 = vmatprep.mubr.f32.mxu0 0.0
    %1437 = vmatmul.mubr.f32.gmra.mxu0 %v52
    %v1438 = vpop.f32.mrf.mxu0
    %v1439 = vadd.f32 %v648, %v1438
    %v1440 = vpop.f32.mrf.mxu0
    %v1441 = vadd.f32 %v652, %v1440
    %1442 = vdwg.mxu0
    %1443 = vmatprep.subr.mxu0 %v554
    %1444 = vmatpush1.msra.mxu0 %v553
    %1445 = vmatprep.subr.mxu0 %v522
    %1446 = vmatpush1.msra.mxu0 %v521
    %1447 = vmatprep.subr.mxu0 %v490
    %1448 = vmatpush1.msra.mxu0 %v489
    %1449 = vmatprep.subr.mxu0 %v458
    %1450 = vmatpush1.msra.mxu0 %v457
    %1451 = vmatprep.subr.mxu0 %v426
    %1452 = vmatpush1.msra.mxu0 %v425
    %1453 = vmatprep.subr.mxu0 %v394
    %1454 = vmatpush1.msra.mxu0 %v393
    %1455 = vmatprep.subr.mxu0 %v362
    %1456 = vmatpush1.msra.mxu0 %v361
    %1457 = vmatprep.subr.mxu0 %v330
    %1458 = vmatpush1.msra.mxu0 %v329
    %1459 = vmatprep.subr.mxu0 %v298
    %1460 = vmatpush1.msra.mxu0 %v297
    %1461 = vmatprep.subr.mxu0 %v266
    %1462 = vmatpush1.msra.mxu0 %v265
    %1463 = vmatprep.subr.mxu0 %v234
    %1464 = vmatpush1.msra.mxu0 %v233
    %1465 = vmatprep.subr.mxu0 %v202
    %1466 = vmatpush1.msra.mxu0 %v201
    %1467 = vmatprep.subr.mxu0 %v170
    %1468 = vmatpush1.msra.mxu0 %v169
    %1469 = vmatprep.subr.mxu0 %v138
    %1470 = vmatpush1.msra.mxu0 %v137
    %1471 = vmatprep.subr.mxu0 %v106
    %1472 = vmatpush1.msra.mxu0 %v105
    %1473 = vmatprep.subr.mxu0 %v74
    %1474 = vmatpush1.msra.mxu0 %v73
    %1475 = vmatprep.subr.mxu0 0.0
    %1476 = vmatpush2.msra.mxu0 0.0
    %1477 = vmatprep.subr.mxu0 0.0
    %1478 = vmatpush2.msra.mxu0 0.0
    %1479 = vmatprep.subr.mxu0 0.0
    %1480 = vmatpush2.msra.mxu0 0.0
    %1481 = vmatprep.subr.mxu0 0.0
    %1482 = vmatpush2.msra.mxu0 0.0
    %1483 = vmatprep.subr.mxu0 0.0
    %1484 = vmatpush2.msra.mxu0 0.0
    %1485 = vmatprep.subr.mxu0 0.0
    %1486 = vmatpush2.msra.mxu0 0.0
    %1487 = vmatprep.subr.mxu0 0.0
    %1488 = vmatpush2.msra.mxu0 0.0
    %1489 = vmatprep.subr.mxu0 0.0
    %1490 = vmatpush2.msra.mxu0 0.0
    %1491 = vmatprep.subr.mxu0 0.0
    %1492 = vmatpush2.msra.mxu0 0.0
    %1493 = vmatprep.subr.mxu0 0.0
    %1494 = vmatpush2.msra.mxu0 0.0
    %1495 = vmatprep.subr.mxu0 0.0
    %1496 = vmatpush2.msra.mxu0 0.0
    %1497 = vmatprep.subr.mxu0 0.0
    %1498 = vmatpush2.msra.mxu0 0.0
    %1499 = vmatprep.subr.mxu0 0.0
    %1500 = vmatpush2.msra.mxu0 0.0
    %1501 = vmatprep.subr.mxu0 0.0
    %1502 = vmatpush2.msra.mxu0 0.0
    %1503 = vmatprep.subr.mxu0 0.0
    %1504 = vmatpush2.msra.mxu0 0.0
    %1505 = vmatprep.subr.mxu0 0.0
    %1506 = vmatpush2.msra.mxu0 0.0
    %1507 = vmatprep.mubr.f32.mxu0 0.0
    %1508 = vmatmul.mubr.f32.gmra.mxu0 %v52
    %v1509 = vpop.f32.mrf.mxu0
    %v1510 = vadd.f32 %v656, %v1509
    %v1511 = vpop.f32.mrf.mxu0
    %v1512 = vadd.f32 %v660, %v1511
    %1513 = vdwg.mxu0
    %1514 = vmatprep.subr.mxu0 %v556
    %1515 = vmatpush1.msra.mxu0 %v555
    %1516 = vmatprep.subr.mxu0 %v524
    %1517 = vmatpush1.msra.mxu0 %v523
    %1518 = vmatprep.subr.mxu0 %v492
    %1519 = vmatpush1.msra.mxu0 %v491
    %1520 = vmatprep.subr.mxu0 %v460
    %1521 = vmatpush1.msra.mxu0 %v459
    %1522 = vmatprep.subr.mxu0 %v428
    %1523 = vmatpush1.msra.mxu0 %v427
    %1524 = vmatprep.subr.mxu0 %v396
    %1525 = vmatpush1.msra.mxu0 %v395
    %1526 = vmatprep.subr.mxu0 %v364
    %1527 = vmatpush1.msra.mxu0 %v363
    %1528 = vmatprep.subr.mxu0 %v332
    %1529 = vmatpush1.msra.mxu0 %v331
    %1530 = vmatprep.subr.mxu0 %v300
    %1531 = vmatpush1.msra.mxu0 %v299
    %1532 = vmatprep.subr.mxu0 %v268
    %1533 = vmatpush1.msra.mxu0 %v267
    %1534 = vmatprep.subr.mxu0 %v236
    %1535 = vmatpush1.msra.mxu0 %v235
    %1536 = vmatprep.subr.mxu0 %v204
    %1537 = vmatpush1.msra.mxu0 %v203
    %1538 = vmatprep.subr.mxu0 %v172
    %1539 = vmatpush1.msra.mxu0 %v171
    %1540 = vmatprep.subr.mxu0 %v140
    %1541 = vmatpush1.msra.mxu0 %v139
    %1542 = vmatprep.subr.mxu0 %v108
    %1543 = vmatpush1.msra.mxu0 %v107
    %1544 = vmatprep.subr.mxu0 %v76
    %1545 = vmatpush1.msra.mxu0 %v75
    %1546 = vmatprep.subr.mxu0 0.0
    %1547 = vmatpush2.msra.mxu0 0.0
    %1548 = vmatprep.subr.mxu0 0.0
    %1549 = vmatpush2.msra.mxu0 0.0
    %1550 = vmatprep.subr.mxu0 0.0
    %1551 = vmatpush2.msra.mxu0 0.0
    %1552 = vmatprep.subr.mxu0 0.0
    %1553 = vmatpush2.msra.mxu0 0.0
    %1554 = vmatprep.subr.mxu0 0.0
    %1555 = vmatpush2.msra.mxu0 0.0
    %1556 = vmatprep.subr.mxu0 0.0
    %1557 = vmatpush2.msra.mxu0 0.0
    %1558 = vmatprep.subr.mxu0 0.0
    %1559 = vmatpush2.msra.mxu0 0.0
    %1560 = vmatprep.subr.mxu0 0.0
    %1561 = vmatpush2.msra.mxu0 0.0
    %1562 = vmatprep.subr.mxu0 0.0
    %1563 = vmatpush2.msra.mxu0 0.0
    %1564 = vmatprep.subr.mxu0 0.0
    %1565 = vmatpush2.msra.mxu0 0.0
    %1566 = vmatprep.subr.mxu0 0.0
    %1567 = vmatpush2.msra.mxu0 0.0
    %1568 = vmatprep.subr.mxu0 0.0
    %1569 = vmatpush2.msra.mxu0 0.0
    %1570 = vmatprep.subr.mxu0 0.0
    %1571 = vmatpush2.msra.mxu0 0.0
    %1572 = vmatprep.subr.mxu0 0.0
    %1573 = vmatpush2.msra.mxu0 0.0
    %1574 = vmatprep.subr.mxu0 0.0
    %1575 = vmatpush2.msra.mxu0 0.0
    %1576 = vmatprep.subr.mxu0 0.0
    %1577 = vmatpush2.msra.mxu0 0.0
    %1578 = vmatprep.mubr.f32.mxu0 0.0
    %1579 = vmatmul.mubr.f32.gmra.mxu0 %v52
    %v1580 = vpop.f32.mrf.mxu0
    %v1581 = vadd.f32 %v664, %v1580
    %v1582 = vpop.f32.mrf.mxu0
    %v1583 = vadd.f32 %v668, %v1582
    %1584 = vdwg.mxu0
    %1585 = vmatprep.subr.mxu0 %v558
    %1586 = vmatpush1.msra.mxu0 %v557
    %1587 = vmatprep.subr.mxu0 %v526
    %1588 = vmatpush1.msra.mxu0 %v525
    %1589 = vmatprep.subr.mxu0 %v494
    %1590 = vmatpush1.msra.mxu0 %v493
    %1591 = vmatprep.subr.mxu0 %v462
    %1592 = vmatpush1.msra.mxu0 %v461
    %1593 = vmatprep.subr.mxu0 %v430
    %1594 = vmatpush1.msra.mxu0 %v429
    %1595 = vmatprep.subr.mxu0 %v398
    %1596 = vmatpush1.msra.mxu0 %v397
    %1597 = vmatprep.subr.mxu0 %v366
    %1598 = vmatpush1.msra.mxu0 %v365
    %1599 = vmatprep.subr.mxu0 %v334
    %1600 = vmatpush1.msra.mxu0 %v333
    %1601 = vmatprep.subr.mxu0 %v302
    %1602 = vmatpush1.msra.mxu0 %v301
    %1603 = vmatprep.subr.mxu0 %v270
    %1604 = vmatpush1.msra.mxu0 %v269
    %1605 = vmatprep.subr.mxu0 %v238
    %1606 = vmatpush1.msra.mxu0 %v237
    %1607 = vmatprep.subr.mxu0 %v206
    %1608 = vmatpush1.msra.mxu0 %v205
    %1609 = vmatprep.subr.mxu0 %v174
    %1610 = vmatpush1.msra.mxu0 %v173
    %1611 = vmatprep.subr.mxu0 %v142
    %1612 = vmatpush1.msra.mxu0 %v141
    %1613 = vmatprep.subr.mxu0 %v110
    %1614 = vmatpush1.msra.mxu0 %v109
    %1615 = vmatprep.subr.mxu0 %v78
    %1616 = vmatpush1.msra.mxu0 %v77
    %1617 = vmatprep.subr.mxu0 0.0
    %1618 = vmatpush2.msra.mxu0 0.0
    %1619 = vmatprep.subr.mxu0 0.0
    %1620 = vmatpush2.msra.mxu0 0.0
    %1621 = vmatprep.subr.mxu0 0.0
    %1622 = vmatpush2.msra.mxu0 0.0
    %1623 = vmatprep.subr.mxu0 0.0
    %1624 = vmatpush2.msra.mxu0 0.0
    %1625 = vmatprep.subr.mxu0 0.0
    %1626 = vmatpush2.msra.mxu0 0.0
    %1627 = vmatprep.subr.mxu0 0.0
    %1628 = vmatpush2.msra.mxu0 0.0
    %1629 = vmatprep.subr.mxu0 0.0
    %1630 = vmatpush2.msra.mxu0 0.0
    %1631 = vmatprep.subr.mxu0 0.0
    %1632 = vmatpush2.msra.mxu0 0.0
    %1633 = vmatprep.subr.mxu0 0.0
    %1634 = vmatpush2.msra.mxu0 0.0
    %1635 = vmatprep.subr.mxu0 0.0
    %1636 = vmatpush2.msra.mxu0 0.0
    %1637 = vmatprep.subr.mxu0 0.0
    %1638 = vmatpush2.msra.mxu0 0.0
    %1639 = vmatprep.subr.mxu0 0.0
    %1640 = vmatpush2.msra.mxu0 0.0
    %1641 = vmatprep.subr.mxu0 0.0
    %1642 = vmatpush2.msra.mxu0 0.0
    %1643 = vmatprep.subr.mxu0 0.0
    %1644 = vmatpush2.msra.mxu0 0.0
    %1645 = vmatprep.subr.mxu0 0.0
    %1646 = vmatpush2.msra.mxu0 0.0
    %1647 = vmatprep.subr.mxu0 0.0
    %1648 = vmatpush2.msra.mxu0 0.0
    %1649 = vmatprep.mubr.f32.mxu0 0.0
    %1650 = vmatmul.mubr.f32.gmra.mxu0 %v52
    %v1651 = vpop.f32.mrf.mxu0
    %v1652 = vadd.f32 %v672, %v1651
    %v1653 = vpop.f32.mrf.mxu0
    %v1654 = vadd.f32 %v676, %v1653
    %1655 = vdwg.mxu0
    %1656 = vmatprep.subr.mxu0 %v560
    %1657 = vmatpush1.msra.mxu0 %v559
    %1658 = vmatprep.subr.mxu0 %v528
    %1659 = vmatpush1.msra.mxu0 %v527
    %1660 = vmatprep.subr.mxu0 %v496
    %1661 = vmatpush1.msra.mxu0 %v495
    %1662 = vmatprep.subr.mxu0 %v464
    %1663 = vmatpush1.msra.mxu0 %v463
    %1664 = vmatprep.subr.mxu0 %v432
    %1665 = vmatpush1.msra.mxu0 %v431
    %1666 = vmatprep.subr.mxu0 %v400
    %1667 = vmatpush1.msra.mxu0 %v399
    %1668 = vmatprep.subr.mxu0 %v368
    %1669 = vmatpush1.msra.mxu0 %v367
    %1670 = vmatprep.subr.mxu0 %v336
    %1671 = vmatpush1.msra.mxu0 %v335
    %1672 = vmatprep.subr.mxu0 %v304
    %1673 = vmatpush1.msra.mxu0 %v303
    %1674 = vmatprep.subr.mxu0 %v272
    %1675 = vmatpush1.msra.mxu0 %v271
    %1676 = vmatprep.subr.mxu0 %v240
    %1677 = vmatpush1.msra.mxu0 %v239
    %1678 = vmatprep.subr.mxu0 %v208
    %1679 = vmatpush1.msra.mxu0 %v207
    %1680 = vmatprep.subr.mxu0 %v176
    %1681 = vmatpush1.msra.mxu0 %v175
    %1682 = vmatprep.subr.mxu0 %v144
    %1683 = vmatpush1.msra.mxu0 %v143
    %1684 = vmatprep.subr.mxu0 %v112
    %1685 = vmatpush1.msra.mxu0 %v111
    %1686 = vmatprep.subr.mxu0 %v80
    %1687 = vmatpush1.msra.mxu0 %v79
    %1688 = vmatprep.subr.mxu0 0.0
    %1689 = vmatpush2.msra.mxu0 0.0
    %1690 = vmatprep.subr.mxu0 0.0
    %1691 = vmatpush2.msra.mxu0 0.0
    %1692 = vmatprep.subr.mxu0 0.0
    %1693 = vmatpush2.msra.mxu0 0.0
    %1694 = vmatprep.subr.mxu0 0.0
    %1695 = vmatpush2.msra.mxu0 0.0
    %1696 = vmatprep.subr.mxu0 0.0
    %1697 = vmatpush2.msra.mxu0 0.0
    %1698 = vmatprep.subr.mxu0 0.0
    %1699 = vmatpush2.msra.mxu0 0.0
    %1700 = vmatprep.subr.mxu0 0.0
    %1701 = vmatpush2.msra.mxu0 0.0
    %1702 = vmatprep.subr.mxu0 0.0
    %1703 = vmatpush2.msra.mxu0 0.0
    %1704 = vmatprep.subr.mxu0 0.0
    %1705 = vmatpush2.msra.mxu0 0.0
    %1706 = vmatprep.subr.mxu0 0.0
    %1707 = vmatpush2.msra.mxu0 0.0
    %1708 = vmatprep.subr.mxu0 0.0
    %1709 = vmatpush2.msra.mxu0 0.0
    %1710 = vmatprep.subr.mxu0 0.0
    %1711 = vmatpush2.msra.mxu0 0.0
    %1712 = vmatprep.subr.mxu0 0.0
    %1713 = vmatpush2.msra.mxu0 0.0
    %1714 = vmatprep.subr.mxu0 0.0
    %1715 = vmatpush2.msra.mxu0 0.0
    %1716 = vmatprep.subr.mxu0 0.0
    %1717 = vmatpush2.msra.mxu0 0.0
    %1718 = vmatprep.subr.mxu0 0.0
    %1719 = vmatpush2.msra.mxu0 0.0
    %1720 = vmatprep.mubr.f32.mxu0 0.0
    %1721 = vmatmul.mubr.f32.gmra.mxu0 %v52
    %v1722 = vpop.f32.mrf.mxu0
    %v1723 = vadd.f32 %v680, %v1722
    %v1724 = vpop.f32.mrf.mxu0
    %v1725 = vadd.f32 %v684, %v1724
    %1726 = vdwg.mxu0
    %1727 = vmatprep.subr.mxu0 %v562
    %1728 = vmatpush1.msra.mxu0 %v561
    %1729 = vmatprep.subr.mxu0 %v530
    %1730 = vmatpush1.msra.mxu0 %v529
    %1731 = vmatprep.subr.mxu0 %v498
    %1732 = vmatpush1.msra.mxu0 %v497
    %1733 = vmatprep.subr.mxu0 %v466
    %1734 = vmatpush1.msra.mxu0 %v465
    %1735 = vmatprep.subr.mxu0 %v434
    %1736 = vmatpush1.msra.mxu0 %v433
    %1737 = vmatprep.subr.mxu0 %v402
    %1738 = vmatpush1.msra.mxu0 %v401
    %1739 = vmatprep.subr.mxu0 %v370
    %1740 = vmatpush1.msra.mxu0 %v369
    %1741 = vmatprep.subr.mxu0 %v338
    %1742 = vmatpush1.msra.mxu0 %v337
    %1743 = vmatprep.subr.mxu0 %v306
    %1744 = vmatpush1.msra.mxu0 %v305
    %1745 = vmatprep.subr.mxu0 %v274
    %1746 = vmatpush1.msra.mxu0 %v273
    %1747 = vmatprep.subr.mxu0 %v242
    %1748 = vmatpush1.msra.mxu0 %v241
    %1749 = vmatprep.subr.mxu0 %v210
    %1750 = vmatpush1.msra.mxu0 %v209
    %1751 = vmatprep.subr.mxu0 %v178
    %1752 = vmatpush1.msra.mxu0 %v177
    %1753 = vmatprep.subr.mxu0 %v146
    %1754 = vmatpush1.msra.mxu0 %v145
    %1755 = vmatprep.subr.mxu0 %v114
    %1756 = vmatpush1.msra.mxu0 %v113
    %1757 = vmatprep.subr.mxu0 %v82
    %1758 = vmatpush1.msra.mxu0 %v81
    %1759 = vmatprep.subr.mxu0 0.0
    %1760 = vmatpush2.msra.mxu0 0.0
    %1761 = vmatprep.subr.mxu0 0.0
    %1762 = vmatpush2.msra.mxu0 0.0
    %1763 = vmatprep.subr.mxu0 0.0
    %1764 = vmatpush2.msra.mxu0 0.0
    %1765 = vmatprep.subr.mxu0 0.0
    %1766 = vmatpush2.msra.mxu0 0.0
    %1767 = vmatprep.subr.mxu0 0.0
    %1768 = vmatpush2.msra.mxu0 0.0
    %1769 = vmatprep.subr.mxu0 0.0
    %1770 = vmatpush2.msra.mxu0 0.0
    %1771 = vmatprep.subr.mxu0 0.0
    %1772 = vmatpush2.msra.mxu0 0.0
    %1773 = vmatprep.subr.mxu0 0.0
    %1774 = vmatpush2.msra.mxu0 0.0
    %1775 = vmatprep.subr.mxu0 0.0
    %1776 = vmatpush2.msra.mxu0 0.0
    %1777 = vmatprep.subr.mxu0 0.0
    %1778 = vmatpush2.msra.mxu0 0.0
    %1779 = vmatprep.subr.mxu0 0.0
    %1780 = vmatpush2.msra.mxu0 0.0
    %1781 = vmatprep.subr.mxu0 0.0
    %1782 = vmatpush2.msra.mxu0 0.0
    %1783 = vmatprep.subr.mxu0 0.0
    %1784 = vmatpush2.msra.mxu0 0.0
    %1785 = vmatprep.subr.mxu0 0.0
    %1786 = vmatpush2.msra.mxu0 0.0
    %1787 = vmatprep.subr.mxu0 0.0
    %1788 = vmatpush2.msra.mxu0 0.0
    %1789 = vmatprep.subr.mxu0 0.0
    %1790 = vmatpush2.msra.mxu0 0.0
    %1791 = vmatprep.mubr.f32.mxu0 0.0
    %1792 = vmatmul.mubr.f32.gmra.mxu0 %v52
    %v1793 = vpop.f32.mrf.mxu0
    %v1794 = vadd.f32 %v688, %v1793
    %v1795 = vpop.f32.mrf.mxu0
    %v1796 = vadd.f32 %v692, %v1795
    %1797 = vdwg.mxu0
    %1798 = vmatprep.subr.mxu0 %v564
    %1799 = vmatpush1.msra.mxu0 %v563
    %1800 = vmatprep.subr.mxu0 %v532
    %1801 = vmatpush1.msra.mxu0 %v531
    %1802 = vmatprep.subr.mxu0 %v500
    %1803 = vmatpush1.msra.mxu0 %v499
    %1804 = vmatprep.subr.mxu0 %v468
    %1805 = vmatpush1.msra.mxu0 %v467
    %1806 = vmatprep.subr.mxu0 %v436
    %1807 = vmatpush1.msra.mxu0 %v435
    %1808 = vmatprep.subr.mxu0 %v404
    %1809 = vmatpush1.msra.mxu0 %v403
    %1810 = vmatprep.subr.mxu0 %v372
    %1811 = vmatpush1.msra.mxu0 %v371
    %1812 = vmatprep.subr.mxu0 %v340
    %1813 = vmatpush1.msra.mxu0 %v339
    %1814 = vmatprep.subr.mxu0 %v308
    %1815 = vmatpush1.msra.mxu0 %v307
    %1816 = vmatprep.subr.mxu0 %v276
    %1817 = vmatpush1.msra.mxu0 %v275
    %1818 = vmatprep.subr.mxu0 %v244
    %1819 = vmatpush1.msra.mxu0 %v243
    %1820 = vmatprep.subr.mxu0 %v212
    %1821 = vmatpush1.msra.mxu0 %v211
    %1822 = vmatprep.subr.mxu0 %v180
    %1823 = vmatpush1.msra.mxu0 %v179
    %1824 = vmatprep.subr.mxu0 %v148
    %1825 = vmatpush1.msra.mxu0 %v147
    %1826 = vmatprep.subr.mxu0 %v116
    %1827 = vmatpush1.msra.mxu0 %v115
    %1828 = vmatprep.subr.mxu0 %v84
    %1829 = vmatpush1.msra.mxu0 %v83
    %1830 = vmatprep.subr.mxu0 0.0
    %1831 = vmatpush2.msra.mxu0 0.0
    %1832 = vmatprep.subr.mxu0 0.0
    %1833 = vmatpush2.msra.mxu0 0.0
    %1834 = vmatprep.subr.mxu0 0.0
    %1835 = vmatpush2.msra.mxu0 0.0
    %1836 = vmatprep.subr.mxu0 0.0
    %1837 = vmatpush2.msra.mxu0 0.0
    %1838 = vmatprep.subr.mxu0 0.0
    %1839 = vmatpush2.msra.mxu0 0.0
    %1840 = vmatprep.subr.mxu0 0.0
    %1841 = vmatpush2.msra.mxu0 0.0
    %1842 = vmatprep.subr.mxu0 0.0
    %1843 = vmatpush2.msra.mxu0 0.0
    %1844 = vmatprep.subr.mxu0 0.0
    %1845 = vmatpush2.msra.mxu0 0.0
    %1846 = vmatprep.subr.mxu0 0.0
    %1847 = vmatpush2.msra.mxu0 0.0
    %1848 = vmatprep.subr.mxu0 0.0
    %1849 = vmatpush2.msra.mxu0 0.0
    %1850 = vmatprep.subr.mxu0 0.0
    %1851 = vmatpush2.msra.mxu0 0.0
    %1852 = vmatprep.subr.mxu0 0.0
    %1853 = vmatpush2.msra.mxu0 0.0
    %1854 = vmatprep.subr.mxu0 0.0
    %1855 = vmatpush2.msra.mxu0 0.0
    %1856 = vmatprep.subr.mxu0 0.0
    %1857 = vmatpush2.msra.mxu0 0.0
    %1858 = vmatprep.subr.mxu0 0.0
    %1859 = vmatpush2.msra.mxu0 0.0
    %1860 = vmatprep.subr.mxu0 0.0
    %1861 = vmatpush2.msra.mxu0 0.0
    %1862 = vmatprep.mubr.f32.mxu0 0.0
    %1863 = vmatmul.mubr.f32.gmra.mxu0 %v52
    %v1864 = vpop.f32.mrf.mxu0
    %v1865 = vadd.f32 %v696, %v1864
    %v1866 = vpop.f32.mrf.mxu0
    %v1867 = vadd.f32 %v700, %v1866
    %1868 = vdwg.mxu0
    %1869 = vst [vmem:[#allocation8] sm:$0xff] %v800
    %1870 = vst [vmem:[#allocation8 + $0x8] sm:$0xff] %v802
    %1871 = vst [vmem:[#allocation8 + $0x10] sm:$0xff] %v871
    %1872 = vst [vmem:[#allocation8 + $0x18] sm:$0xff] %v873
    %1873 = vst [vmem:[#allocation8 + $0x20] sm:$0xff] %v942
    %1874 = vst [vmem:[#allocation8 + $0x28] sm:$0xff] %v944
    %1875 = vst [vmem:[#allocation8 + $0x30] sm:$0xff] %v1013
    %1876 = vst [vmem:[#allocation8 + $0x38] sm:$0xff] %v1015
    %1877 = vst [vmem:[#allocation8 + $0x40] sm:$0xff] %v1084
    %1878 = vst [vmem:[#allocation8 + $0x48] sm:$0xff] %v1086
    %1879 = vst [vmem:[#allocation8 + $0x50] sm:$0xff] %v1155
    %1880 = vst [vmem:[#allocation8 + $0x58] sm:$0xff] %v1157
    %1881 = vst [vmem:[#allocation8 + $0x60] sm:$0xff] %v1226
    %1882 = vst [vmem:[#allocation8 + $0x68] sm:$0xff] %v1228
    %1883 = vst [vmem:[#allocation8 + $0x70] sm:$0xff] %v1297
    %1884 = vst [vmem:[#allocation8 + $0x78] sm:$0xff] %v1299
    %1885 = vst [vmem:[#allocation8 + $0x80] sm:$0xff] %v1368
    %1886 = vst [vmem:[#allocation8 + $0x88] sm:$0xff] %v1370
    %1887 = vst [vmem:[#allocation8 + $0x90] sm:$0xff] %v1439
    %1888 = vst [vmem:[#allocation8 + $0x98] sm:$0xff] %v1441
    %1889 = vst [vmem:[#allocation8 + $0xa0] sm:$0xff] %v1510
    %1890 = vst [vmem:[#allocation8 + $0xa8] sm:$0xff] %v1512
    %1891 = vst [vmem:[#allocation8 + $0xb0] sm:$0xff] %v1581
    %1892 = vst [vmem:[#allocation8 + $0xb8] sm:$0xff] %v1583
    %1893 = vst [vmem:[#allocation8 + $0xc0] sm:$0xff] %v1652
    %1894 = vst [vmem:[#allocation8 + $0xc8] sm:$0xff] %v1654
    %1895 = vst [vmem:[#allocation8 + $0xd0] sm:$0xff] %v1723
    %1896 = vst [vmem:[#allocation8 + $0xd8] sm:$0xff] %v1725
    %1897 = vst [vmem:[#allocation8 + $0xe0] sm:$0xff] %v1794
    %1898 = vst [vmem:[#allocation8 + $0xe8] sm:$0xff] %v1796
    %1899 = vst [vmem:[#allocation8 + $0xf0] sm:$0xff] %v1865
    %1900 = vst [vmem:[#allocation8 + $0xf8] sm:$0xff] %v1867
    // Predicated region
    $region26: #{tpu_custom_call.1} parent=1 // pred_check
      _
    $region27: #{tpu_custom_call.1} parent=1 // pred_check_branch
      %1902 = sbr.rel (0) target = $region29
    $region28: #{tpu_custom_call.1} parent=1 // pred_region
      %s1904 = ssub.s32 4096, 4096
      %1905 = vsyncadd [#allocation4], %s1904
      %s1907 = sshll.u32 [#allocation8], 4
      %s1908 = int_to_ptr.vmem [resolvable:$true] %s1907
      %1910 = dma.vmem_to_hbm [thread:$0]  %s1908, 4096, %s3, [#allocation4]
    $region29: #{tpu_custom_call.1} parent=1 // pred_fallthru
      _
    // Predicated region
    $region30: #{tpu_custom_call.1} parent=1 // pred_check
      _
    $region31: #{tpu_custom_call.1} parent=1 // pred_check_branch
      %1912 = sbr.rel (0) target = $region33
    $region32: #{tpu_custom_call.1} parent=1 // pred_region
      %1913 = dma.done [#allocation4], 4096
    $region33: #{tpu_custom_call.1} parent=1 // pred_fallthru
      _
    %1914 = vsyncpa [#allocation3], 1
    %1915 = vsyncpa [#allocation6], 1
    %1916 = vsyncpa [#allocation4], 1

</llo_original>
